<compile_context>
chip_gen: v7x
topology: tpu7x:2x2x1
jax: 0.10.0
libtpu: 0.0.40
codegen_flags: <defaults>
</compile_context>

<pallas_src>
import functools

import jax
import jax.numpy as jnp
from jax.experimental import pallas as pl
from jax.experimental.pallas import tpu as pltpu


# ----------------------------------------------------------------------------
# Tiling helpers
# ----------------------------------------------------------------------------
def _pick_tm(m, row_bytes, target=1024, vmem_budget=12 << 20):
    """Row-tile size: big enough to amortize per-grid-step pipeline overhead,
    small enough that double-buffered blocks stay well inside v7x's smaller
    VMEM (64 MiB physical / 32 MiB scoped default), and >= 2 grid steps when
    possible so the "parallel" axis can be sharded across v7x's two cores."""
    cap = max(8, (vmem_budget // max(2 * row_bytes, 1)) // 8 * 8)
    tm = min(target, cap, max(8, -(-m // 8) * 8))
    if m >= 16:
        tm = min(tm, max(8, (m // 2) // 8 * 8))
    return max(8, tm)


def _pad_rows(x, mp):
    m = x.shape[0]
    if mp == m:
        return x
    return jnp.pad(x, ((0, mp - m),) + ((0, 0),) * (x.ndim - 1))


# ----------------------------------------------------------------------------
# Pallas kernels
# ----------------------------------------------------------------------------
def _conv1_expand_kernel(p_ref, w1a_ref, s1a_ref, b1a_ref,
                         w1b_ref, s1b_ref, b1b_ref,
                         we_ref, se_ref, be_ref,
                         x1_ref, x2e_ref):
    """conv1 (im2col matmul) + folded BN + ReLU, split into the two stem
    branches, plus the expand 1x1 (+BN+ReLU) on the x2 half — one row pass,
    no intermediate HBM round trip, no XLA channel-slice copy."""
    p = p_ref[...]
    # x1 half of conv1
    y1 = jnp.dot(p, w1a_ref[...], preferred_element_type=jnp.float32)
    y1 = jnp.maximum(y1 * s1a_ref[...] + b1a_ref[...], 0.0)
    x1_ref[...] = y1.astype(x1_ref.dtype)
    # x2 half of conv1 -> expand 1x1 (MXU), affine + ReLU in f32
    y2 = jnp.dot(p, w1b_ref[...], preferred_element_type=jnp.float32)
    y2 = jnp.maximum(y2 * s1b_ref[...] + b1b_ref[...], 0.0)
    z = jnp.dot(y2.astype(we_ref.dtype), we_ref[...],
                preferred_element_type=jnp.float32)
    z = jnp.maximum(z * se_ref[...] + be_ref[...], 0.0)
    x2e_ref[...] = z.astype(x2e_ref.dtype)


def _fused_tail_kernel(pb_ref, pe_ref, wb_ref, we_ref, s_ref, b_ref, o_ref):
    """Both depthwise-3x3(s2)+pointwise-1x1 branches as two MXU matmuls into
    one f32 accumulator; weight columns are pre-permuted so the single store
    already is the concat + channel_shuffle result (contiguous, out_ch wide)."""
    acc = jnp.dot(pb_ref[...], wb_ref[...], preferred_element_type=jnp.float32)
    acc = acc + jnp.dot(pe_ref[...], we_ref[...],
                        preferred_element_type=jnp.float32)
    z = jnp.maximum(acc * s_ref[...] + b_ref[...], 0.0)
    o_ref[...] = z.astype(o_ref.dtype)


# ----------------------------------------------------------------------------
# pallas_call wrappers
# ----------------------------------------------------------------------------
def conv1_expand(patches, w1a, s1a, b1a, w1b, s1b, b1b, we, se, be,
                 out_dtype, tm_target=1024):
    m, k = patches.shape
    bc, sb, mid = w1a.shape[1], w1b.shape[1], we.shape[1]
    esz = jnp.dtype(patches.dtype).itemsize
    osz = jnp.dtype(out_dtype).itemsize
    row_bytes = k * esz + (bc + mid) * osz + (sb + mid) * 4
    tm = _pick_tm(m, row_bytes, tm_target)
    mp = -(-m // tm) * tm
    patches = _pad_rows(patches, mp)
    row = lambda i: (i, 0)
    full = lambda i: (0, 0)
    x1, x2e = pl.pallas_call(
        _conv1_expand_kernel,
        out_shape=(jax.ShapeDtypeStruct((mp, bc), out_dtype),
                   jax.ShapeDtypeStruct((mp, mid), out_dtype)),
        grid_spec=pltpu.PrefetchScalarGridSpec(
            num_scalar_prefetch=0,
            grid=(mp // tm,),
            in_specs=[
                pl.BlockSpec((tm, k), row),
                pl.BlockSpec((k, bc), full), pl.BlockSpec((1, bc), full),
                pl.BlockSpec((1, bc), full),
                pl.BlockSpec((k, sb), full), pl.BlockSpec((1, sb), full),
                pl.BlockSpec((1, sb), full),
                pl.BlockSpec((sb, mid), full), pl.BlockSpec((1, mid), full),
                pl.BlockSpec((1, mid), full),
            ],
            out_specs=(pl.BlockSpec((tm, bc), row),
                       pl.BlockSpec((tm, mid), row)),
        ),
        compiler_params=pltpu.CompilerParams(
            dimension_semantics=("parallel",)),
    )(patches, w1a, s1a, b1a, w1b, s1b, b1b, we, se, be)
    return x1[:m], x2e[:m]


def fused_tail(pb, pe, wb, we, scale, bias, out_dtype, tm_target=1024):
    m, kb = pb.shape
    ke = pe.shape[1]
    cout = wb.shape[1]
    esz = jnp.dtype(pb.dtype).itemsize
    row_bytes = (kb + ke) * esz + cout * (4 + jnp.dtype(out_dtype).itemsize)
    tm = _pick_tm(m, row_bytes, tm_target)
    mp = -(-m // tm) * tm
    pb = _pad_rows(pb, mp)
    pe = _pad_rows(pe, mp)
    row = lambda i: (i, 0)
    full = lambda i: (0, 0)
    out = pl.pallas_call(
        _fused_tail_kernel,
        out_shape=jax.ShapeDtypeStruct((mp, cout), out_dtype),
        grid_spec=pltpu.PrefetchScalarGridSpec(
            num_scalar_prefetch=0,
            grid=(mp // tm,),
            in_specs=[
                pl.BlockSpec((tm, kb), row),
                pl.BlockSpec((tm, ke), row),
                pl.BlockSpec((kb, cout), full),
                pl.BlockSpec((ke, cout), full),
                pl.BlockSpec((1, cout), full),
                pl.BlockSpec((1, cout), full),
            ],
            out_specs=pl.BlockSpec((tm, cout), row),
        ),
        compiler_params=pltpu.CompilerParams(
            dimension_semantics=("parallel",)),
    )(pb, pe, wb, we, scale, bias)
    return out[:m]


# ----------------------------------------------------------------------------
# Glue: im2col for 3x3 / stride 2 / pad 1 (XLA strided slices; see TODO above)
# ----------------------------------------------------------------------------
def im2col_3x3_s2(x):
    # x: (N, H, W, C) -> (N, Ho, Wo, 9, C), tap order k = kh*3 + kw
    n, h, w, c = x.shape
    ho, wo = (h + 1) // 2, (w + 1) // 2
    xp = jnp.pad(x, ((0, 0), (1, 1), (1, 1), (0, 0)))
    taps = [xp[:, kh:kh + 2 * ho:2, kw:kw + 2 * wo:2, :]
            for kh in range(3) for kw in range(3)]
    return jnp.stack(taps, axis=3)


# ----------------------------------------------------------------------------
# Parameters (deterministic synthetic init; BN folded into scale/bias)
# ----------------------------------------------------------------------------
def make_params(key, in_ch, stem, out_ch, expand_ratio):
    mid = int(round(stem * expand_ratio))
    bc = stem // 2
    inc = out_ch - bc if stem == out_ch else out_ch - stem
    lin_out = bc if stem == out_ch else stem
    cfg = dict(in_ch=in_ch, stem=stem, out_ch=out_ch, mid=mid, bc=bc,
               inc=inc, lin_out=lin_out)

    keys = iter(jax.random.split(key, 64))

    def nrm(shape, s=0.1):
        return s * jax.random.normal(next(keys), shape, jnp.float32)

    def bn(c):
        gamma = 1.0 + 0.1 * jax.random.normal(next(keys), (c,), jnp.float32)
        beta = 0.1 * jax.random.normal(next(keys), (c,), jnp.float32)
        mean = 0.1 * jax.random.normal(next(keys), (c,), jnp.float32)
        var = 1.0 + 0.5 * jax.random.uniform(next(keys), (c,), jnp.float32)
        return gamma, beta, mean, var

    def fold(bn_p, conv_bias):
        gamma, beta, mean, var = bn_p
        scale = gamma / jnp.sqrt(var + 1e-5)
        return scale, beta - mean * scale + conv_bias * scale

    p = {}
    # conv1: dense 3x3 s2, in_ch -> stem (+bias, BN, ReLU)
    w = nrm((3, 3, in_ch, stem))
    s, b = fold(bn(stem), nrm((stem,)))
    p['conv1_w'], p['conv1_scale'], p['conv1_bias'] = w.reshape(9 * in_ch, stem), s, b
    # expand_conv: 1x1 bc -> mid (+bias, BN, ReLU)
    w = nrm((bc, mid))
    s, b = fold(bn(mid), nrm((mid,)))
    p['expand_w'], p['expand_scale'], p['expand_bias'] = w, s, b
    # depthwise_conv: dw 3x3 s2 on mid (+bias, BN, no ReLU)
    w = nrm((9, mid))
    s, b = fold(bn(mid), nrm((mid,)))
    p['dw_w'], p['dw_scale'], p['dw_bias'] = w, s, b
    # linear_conv: 1x1 mid -> lin_out (+bias, BN, ReLU)
    w = nrm((mid, lin_out))
    s, b = fold(bn(lin_out), nrm((lin_out,)))
    p['linear_w'], p['linear_scale'], p['linear_bias'] = w, s, b
    # branch1 depthwise: dw 3x3 s2 on bc (+bias, BN, no mid ReLU)
    w = nrm((9, bc))
    s, b = fold(bn(bc), nrm((bc,)))
    p['b1_dw_w'], p['b1_dw_scale'], p['b1_dw_bias'] = w, s, b
    # branch1 pointwise: 1x1 bc -> inc (+bias, BN, ReLU)
    w = nrm((bc, inc))
    s, b = fold(bn(inc), nrm((inc,)))
    p['b1_pw_w'], p['b1_pw_scale'], p['b1_pw_bias'] = w, s, b
    return p, cfg


def prepare_pallas_params(p, cfg, compute_dtype):
    """Fold / fuse / permute module weights for the two fused kernels.

    - conv1 weights split into the x1 / x2 channel halves.
    - Each depthwise-3x3 + 1x1 pair folded into one matmul weight (no ReLU
      between them):  Wf[(k,c),d] = dw_w[k,c]*dw_scale[c]*W_pw[c,d],
      bias_f = pw_bias + pw_scale * (dw_bias @ W_pw).
    - concat([branch1, x2], C) + channel_shuffle(groups=2) fused by scattering
      each branch's weight columns / scale / bias to the shuffled positions.
    """
    cd = compute_dtype
    bc, mid = cfg['bc'], cfg['mid']
    inc, lin_out, out_ch = cfg['inc'], cfg['lin_out'], cfg['out_ch']
    fp = {}

    # conv1 split + expand
    w1, s1, b1 = p['conv1_w'], p['conv1_scale'], p['conv1_bias']
    fp['w1a'] = w1[:, :bc].astype(cd)
    fp['s1a'], fp['b1a'] = s1[:bc].reshape(1, -1), b1[:bc].reshape(1, -1)
    fp['w1b'] = w1[:, bc:].astype(cd)
    fp['s1b'], fp['b1b'] = s1[bc:].reshape(1, -1), b1[bc:].reshape(1, -1)
    fp['we'] = p['expand_w'].astype(cd)
    fp['se'] = p['expand_scale'].reshape(1, -1)
    fp['be'] = p['expand_bias'].reshape(1, -1)

    # shuffled output column for concat channel c (channel_shuffle, groups=2)
    cpg = out_ch // 2
    col = lambda c: (c % cpg) * 2 + (c // cpg)
    cols_a = jnp.array([col(d) for d in range(inc)])
    cols_b = jnp.array([col(inc + d) for d in range(lin_out)])

    def fuse_dw_pw(dw_w, dw_s, dw_b, pw_w, pw_s, pw_b):
        wf = dw_w[:, :, None] * dw_s[None, :, None] * pw_w[None, :, :]
        wf = wf.reshape(-1, pw_w.shape[1])          # (9*C, D), K index k*C + c
        bf = pw_b + pw_s * (dw_b @ pw_w)
        return wf, pw_s, bf

    wfa, sa, ba = fuse_dw_pw(p['b1_dw_w'], p['b1_dw_scale'], p['b1_dw_bias'],
                             p['b1_pw_w'], p['b1_pw_scale'], p['b1_pw_bias'])
    wfb, sb_, bb = fuse_dw_pw(p['dw_w'], p['dw_scale'], p['dw_bias'],
                              p['linear_w'], p['linear_scale'],
                              p['linear_bias'])
    wb = jnp.zeros((9 * bc, out_ch), jnp.float32).at[:, cols_a].set(wfa)
    we = jnp.zeros((9 * mid, out_ch), jnp.float32).at[:, cols_b].set(wfb)
    fp['w_tail_b1'] = wb.astype(cd)
    fp['w_tail_x2'] = we.astype(cd)
    fp['s_tail'] = (jnp.zeros((out_ch,), jnp.float32)
                    .at[cols_a].set(sa).at[cols_b].set(sb_)).reshape(1, -1)
    fp['b_tail'] = (jnp.zeros((out_ch,), jnp.float32)
                    .at[cols_a].set(ba).at[cols_b].set(bb)).reshape(1, -1)
    return fp


# ----------------------------------------------------------------------------
# StemModule forward (Pallas path)
# ----------------------------------------------------------------------------
def stem_forward_nhwc(x, p, cfg, compute_dtype=jnp.float32):
    cd = compute_dtype
    fp = prepare_pallas_params(p, cfg, cd)
    n = x.shape[0]
    x = x.astype(cd)

    # Stage 1: conv1 (3x3 s2) + split + expand 1x1, one fused kernel.
    p1 = im2col_3x3_s2(x)                               # (N, Ho, Wo, 9, Cin)
    ho, wo = p1.shape[1], p1.shape[2]
    m = n * ho * wo
    x1f, x2ef = conv1_expand(p1.reshape(m, -1),
                             fp['w1a'], fp['s1a'], fp['b1a'],
                             fp['w1b'], fp['s1b'], fp['b1b'],
                             fp['we'], fp['se'], fp['be'], out_dtype=cd)
    x1 = x1f.reshape(n, ho, wo, cfg['bc'])
    x2e = x2ef.reshape(n, ho, wo, cfg['mid'])

    # Stage 2: both dw3x3(s2)+1x1 branches + concat + channel_shuffle,
    # one fused kernel writing the final out_ch-wide tiles.
    pb = im2col_3x3_s2(x1)
    pe = im2col_3x3_s2(x2e)
    ho2, wo2 = pb.shape[1], pb.shape[2]
    m2 = n * ho2 * wo2
    out = fused_tail(pb.reshape(m2, -1), pe.reshape(m2, -1),
                     fp['w_tail_b1'], fp['w_tail_x2'],
                     fp['s_tail'], fp['b_tail'], out_dtype=jnp.float32)
    return out.reshape(n, ho2, wo2, cfg['out_ch'])


def stem_forward(x_nchw, p, cfg, compute_dtype=jnp.float32):
    # NCHW <-> NHWC only at the module boundary (PyTorch parity). Callers that
    # are already NHWC should use stem_forward_nhwc and skip both transposes.
    x = jnp.transpose(x_nchw, (0, 2, 3, 1))
    out = stem_forward_nhwc(x, p, cfg, compute_dtype)
    return jnp.transpose(out, (0, 3, 1, 2))


# ----------------------------------------------------------------------------
# Pure-JAX reference (lax.conv) for correctness check
# ----------------------------------------------------------------------------
def ref_forward(x_nchw, p, cfg, compute_dtype=jnp.float32):
    cd = compute_dtype
    x = jnp.transpose(x_nchw, (0, 2, 3, 1))
    dn = ('NHWC', 'HWIO', 'NHWC')

    def conv3x3(x, wflat, scale, bias, cin, cout, relu):
        w = wflat.reshape(3, 3, cin, cout).astype(cd)
        y = jax.lax.conv_general_dilated(
            x.astype(cd), w, (2, 2), ((1, 1), (1, 1)), dimension_numbers=dn,
            preferred_element_type=jnp.float32)
        y = y * scale + bias
        return jnp.maximum(y, 0.0) if relu else y

    def dw3x3(x, w9, scale, bias, relu):
        c = x.shape[-1]
        w = w9.reshape(3, 3, c)[:, :, None, :].astype(cd)
        y = jax.lax.conv_general_dilated(
            x.astype(cd), w, (2, 2), ((1, 1), (1, 1)), dimension_numbers=dn,
            feature_group_count=c, preferred_element_type=jnp.float32)
        y = y * scale + bias
        return jnp.maximum(y, 0.0) if relu else y

    def pw(x, w, scale, bias, relu):
        y = jnp.einsum('nhwc,cd->nhwd', x.astype(cd), w.astype(cd),
                       preferred_element_type=jnp.float32)
        y = y * scale + bias
        return jnp.maximum(y, 0.0) if relu else y

    y = conv3x3(x, p['conv1_w'], p['conv1_scale'], p['conv1_bias'],
                cfg['in_ch'], cfg['stem'], True)
    bc = cfg['bc']
    x1, x2 = y[..., :bc], y[..., bc:]
    x2 = pw(x2, p['expand_w'], p['expand_scale'], p['expand_bias'], True)
    x2 = dw3x3(x2, p['dw_w'], p['dw_scale'], p['dw_bias'], False)
    x2 = pw(x2, p['linear_w'], p['linear_scale'], p['linear_bias'], True)
    x1 = dw3x3(x1, p['b1_dw_w'], p['b1_dw_scale'], p['b1_dw_bias'], False)
    x1 = pw(x1, p['b1_pw_w'], p['b1_pw_scale'], p['b1_pw_bias'], True)
    out = jnp.concatenate([x1, x2], axis=-1)
    n, h2, w2, c = out.shape
    out = out.reshape(n, h2, w2, 2, c // 2)
    out = jnp.swapaxes(out, -2, -1).reshape(n, h2, w2, c)
    return jnp.transpose(out, (0, 3, 1, 2))


if __name__ == "__main__":
    key = jax.random.PRNGKey(0)
    kx, kp = jax.random.split(key)

    N, Cin, H, W = 2, 4, 16, 16
    stem_channels, out_channels, expand_ratio = 8, 16, 2

    x = jax.random.normal(kx, (N, Cin, H, W), jnp.float32)
    params, cfg = make_params(kp, Cin, stem_channels, out_channels,
                              expand_ratio)

    # f32 path — tight correctness check against the lax.conv reference.
    fwd_f32 = jax.jit(functools.partial(stem_forward, cfg=cfg,
                                        compute_dtype=jnp.float32))
    out = jax.block_until_ready(fwd_f32(x, params))
    assert out.shape == (N, out_channels, H // 4, W // 4), out.shape
    ref = ref_forward(x, params, cfg, compute_dtype=jnp.float32)
    err = float(jnp.max(jnp.abs(out - ref)))
    assert err < 1e-3, f"f32 mismatch vs reference: {err}"

    # bf16 activations/weights with f32 accumulation (halves HBM traffic and
    # raises MXU rate on v6e/v7x); checked against a bf16 lax.conv reference.
    fwd_bf16 = jax.jit(functools.partial(stem_forward, cfg=cfg,
                                         compute_dtype=jnp.bfloat16))
    out_bf = jax.block_until_ready(fwd_bf16(x, params))
    ref_bf = ref_forward(x, params, cfg, compute_dtype=jnp.bfloat16)
    err_bf = float(jnp.max(jnp.abs(out_bf - ref_bf)))
    assert err_bf < 2e-2, f"bf16 mismatch vs reference: {err_bf}"

    print("KERNEL_OK")
</pallas_src>

<mosaic_0001>
module attributes {stable_mosaic.version = 11 : i64} {
  func.func @_conv1_expand_kernel(%arg0: i32, %arg1: memref<64x36xf32, #tpu.memory_space<vmem>>, %arg2: memref<36x4xf32, #tpu.memory_space<vmem>>, %arg3: memref<1x4xf32, #tpu.memory_space<vmem>>, %arg4: memref<1x4xf32, #tpu.memory_space<vmem>>, %arg5: memref<36x4xf32, #tpu.memory_space<vmem>>, %arg6: memref<1x4xf32, #tpu.memory_space<vmem>>, %arg7: memref<1x4xf32, #tpu.memory_space<vmem>>, %arg8: memref<4x16xf32, #tpu.memory_space<vmem>>, %arg9: memref<1x16xf32, #tpu.memory_space<vmem>>, %arg10: memref<1x16xf32, #tpu.memory_space<vmem>>, %arg11: memref<64x4xf32, #tpu.memory_space<vmem>>, %arg12: memref<64x16xf32, #tpu.memory_space<vmem>>) attributes {dimension_semantics = [#tpu.dimension_semantics<parallel>], iteration_bounds = array<i64: 2>, scalar_prefetch = 0 : i64, scratch_operands = 0 : i64, tpu.core_type = #tpu.core_type<tc>, window_params = [{transform_indices = @transform_0, window_bounds = array<i64: 64, 36>}, {pipeline_mode = #tpu.pipeline_mode<synchronous>, transform_indices = @transform_1, window_bounds = array<i64: 36, 4>}, {pipeline_mode = #tpu.pipeline_mode<synchronous>, transform_indices = @transform_2, window_bounds = array<i64: 1, 4>}, {pipeline_mode = #tpu.pipeline_mode<synchronous>, transform_indices = @transform_3, window_bounds = array<i64: 1, 4>}, {pipeline_mode = #tpu.pipeline_mode<synchronous>, transform_indices = @transform_4, window_bounds = array<i64: 36, 4>}, {pipeline_mode = #tpu.pipeline_mode<synchronous>, transform_indices = @transform_5, window_bounds = array<i64: 1, 4>}, {pipeline_mode = #tpu.pipeline_mode<synchronous>, transform_indices = @transform_6, window_bounds = array<i64: 1, 4>}, {pipeline_mode = #tpu.pipeline_mode<synchronous>, transform_indices = @transform_7, window_bounds = array<i64: 4, 16>}, {pipeline_mode = #tpu.pipeline_mode<synchronous>, transform_indices = @transform_8, window_bounds = array<i64: 1, 16>}, {pipeline_mode = #tpu.pipeline_mode<synchronous>, transform_indices = @transform_9, window_bounds = array<i64: 1, 16>}, {transform_indices = @transform_10, window_bounds = array<i64: 64, 4>}, {transform_indices = @transform_11, window_bounds = array<i64: 64, 16>}]} {
    %c0 = arith.constant 0 : index
    %c0_0 = arith.constant 0 : index
    %0 = vector.load %arg1[%c0, %c0_0] : memref<64x36xf32, #tpu.memory_space<vmem>>, vector<64x36xf32>
    %c0_1 = arith.constant 0 : index
    %c0_2 = arith.constant 0 : index
    %1 = vector.load %arg2[%c0_1, %c0_2] : memref<36x4xf32, #tpu.memory_space<vmem>>, vector<36x4xf32>
    %cst = arith.constant dense<0.000000e+00> : vector<64x4xf32>
    %2 = tpu.matmul %0, %1, %cst {dimension_numbers = #tpu.dot_dimension_numbers<[1], [0], [0], [1], [0, 0, 1, 1], [], []>} : vector<64x36xf32>, vector<36x4xf32>, vector<64x4xf32> -> vector<64x4xf32>
    %c0_3 = arith.constant 0 : index
    %c0_4 = arith.constant 0 : index
    %3 = vector.load %arg3[%c0_3, %c0_4] : memref<1x4xf32, #tpu.memory_space<vmem>>, vector<1x4xf32>
    %4 = vector.broadcast %3 : vector<1x4xf32> to vector<64x4xf32>
    %5 = arith.mulf %2, %4 : vector<64x4xf32>
    %c0_5 = arith.constant 0 : index
    %c0_6 = arith.constant 0 : index
    %6 = vector.load %arg4[%c0_5, %c0_6] : memref<1x4xf32, #tpu.memory_space<vmem>>, vector<1x4xf32>
    %7 = vector.broadcast %6 : vector<1x4xf32> to vector<64x4xf32>
    %8 = arith.addf %5, %7 : vector<64x4xf32>
    %cst_7 = arith.constant 0.000000e+00 : f32
    %9 = vector.broadcast %cst_7 : f32 to vector<64x4xf32>
    %10 = arith.maximumf %8, %9 : vector<64x4xf32>
    %c0_8 = arith.constant 0 : index
    %c0_9 = arith.constant 0 : index
    %11 = vector.load %arg11[%c0_8, %c0_9] : memref<64x4xf32, #tpu.memory_space<vmem>>, vector<64x4xf32>
    tpu.vector_store %arg11[%c0_8, %c0_9], %10 {strides = array<i32>} : memref<64x4xf32, #tpu.memory_space<vmem>>, vector<64x4xf32>,
    %c0_10 = arith.constant 0 : index
    %c0_11 = arith.constant 0 : index
    %12 = vector.load %arg5[%c0_10, %c0_11] : memref<36x4xf32, #tpu.memory_space<vmem>>, vector<36x4xf32>
    %cst_12 = arith.constant dense<0.000000e+00> : vector<64x4xf32>
    %13 = tpu.matmul %0, %12, %cst_12 {dimension_numbers = #tpu.dot_dimension_numbers<[1], [0], [0], [1], [0, 0, 1, 1], [], []>} : vector<64x36xf32>, vector<36x4xf32>, vector<64x4xf32> -> vector<64x4xf32>
    %c0_13 = arith.constant 0 : index
    %c0_14 = arith.constant 0 : index
    %14 = vector.load %arg6[%c0_13, %c0_14] : memref<1x4xf32, #tpu.memory_space<vmem>>, vector<1x4xf32>
    %15 = vector.broadcast %14 : vector<1x4xf32> to vector<64x4xf32>
    %16 = arith.mulf %13, %15 : vector<64x4xf32>
    %c0_15 = arith.constant 0 : index
    %c0_16 = arith.constant 0 : index
    %17 = vector.load %arg7[%c0_15, %c0_16] : memref<1x4xf32, #tpu.memory_space<vmem>>, vector<1x4xf32>
    %18 = vector.broadcast %17 : vector<1x4xf32> to vector<64x4xf32>
    %19 = arith.addf %16, %18 : vector<64x4xf32>
    %cst_17 = arith.constant 0.000000e+00 : f32
    %20 = vector.broadcast %cst_17 : f32 to vector<64x4xf32>
    %21 = arith.maximumf %19, %20 : vector<64x4xf32>
    %c0_18 = arith.constant 0 : index
    %c0_19 = arith.constant 0 : index
    %22 = vector.load %arg8[%c0_18, %c0_19] : memref<4x16xf32, #tpu.memory_space<vmem>>, vector<4x16xf32>
    %cst_20 = arith.constant dense<0.000000e+00> : vector<64x16xf32>
    %23 = tpu.matmul %21, %22, %cst_20 {dimension_numbers = #tpu.dot_dimension_numbers<[1], [0], [0], [1], [0, 0, 1, 1], [], []>} : vector<64x4xf32>, vector<4x16xf32>, vector<64x16xf32> -> vector<64x16xf32>
    %c0_21 = arith.constant 0 : index
    %c0_22 = arith.constant 0 : index
    %24 = vector.load %arg9[%c0_21, %c0_22] : memref<1x16xf32, #tpu.memory_space<vmem>>, vector<1x16xf32>
    %25 = vector.broadcast %24 : vector<1x16xf32> to vector<64x16xf32>
    %26 = arith.mulf %23, %25 : vector<64x16xf32>
    %c0_23 = arith.constant 0 : index
    %c0_24 = arith.constant 0 : index
    %27 = vector.load %arg10[%c0_23, %c0_24] : memref<1x16xf32, #tpu.memory_space<vmem>>, vector<1x16xf32>
    %28 = vector.broadcast %27 : vector<1x16xf32> to vector<64x16xf32>
    %29 = arith.addf %26, %28 : vector<64x16xf32>
    %cst_25 = arith.constant 0.000000e+00 : f32
    %30 = vector.broadcast %cst_25 : f32 to vector<64x16xf32>
    %31 = arith.maximumf %29, %30 : vector<64x16xf32>
    %c0_26 = arith.constant 0 : index
    %c0_27 = arith.constant 0 : index
    %32 = vector.load %arg12[%c0_26, %c0_27] : memref<64x16xf32, #tpu.memory_space<vmem>>, vector<64x16xf32>
    tpu.vector_store %arg12[%c0_26, %c0_27], %31 {strides = array<i32>} : memref<64x16xf32, #tpu.memory_space<vmem>>, vector<64x16xf32>,
    return
  }
  func.func @transform_0(%arg0: i32) -> (i32, i32) {
    %c0_i32 = arith.constant 0 : i32
    %c0_i32_0 = arith.constant 0 : i32
    return %arg0, %c0_i32 : i32, i32
  }
  func.func @transform_1(%arg0: i32) -> (i32, i32) {
    %c0_i32 = arith.constant 0 : i32
    %c0_i32_0 = arith.constant 0 : i32
    %c0_i32_1 = arith.constant 0 : i32
    return %c0_i32, %c0_i32_0 : i32, i32
  }
  func.func @transform_2(%arg0: i32) -> (i32, i32) {
    %c0_i32 = arith.constant 0 : i32
    %c0_i32_0 = arith.constant 0 : i32
    %c0_i32_1 = arith.constant 0 : i32
    return %c0_i32, %c0_i32_0 : i32, i32
  }
  func.func @transform_3(%arg0: i32) -> (i32, i32) {
    %c0_i32 = arith.constant 0 : i32
    %c0_i32_0 = arith.constant 0 : i32
    %c0_i32_1 = arith.constant 0 : i32
    return %c0_i32, %c0_i32_0 : i32, i32
  }
  func.func @transform_4(%arg0: i32) -> (i32, i32) {
    %c0_i32 = arith.constant 0 : i32
    %c0_i32_0 = arith.constant 0 : i32
    %c0_i32_1 = arith.constant 0 : i32
    return %c0_i32, %c0_i32_0 : i32, i32
  }
  func.func @transform_5(%arg0: i32) -> (i32, i32) {
    %c0_i32 = arith.constant 0 : i32
    %c0_i32_0 = arith.constant 0 : i32
    %c0_i32_1 = arith.constant 0 : i32
    return %c0_i32, %c0_i32_0 : i32, i32
  }
  func.func @transform_6(%arg0: i32) -> (i32, i32) {
    %c0_i32 = arith.constant 0 : i32
    %c0_i32_0 = arith.constant 0 : i32
    %c0_i32_1 = arith.constant 0 : i32
    return %c0_i32, %c0_i32_0 : i32, i32
  }
  func.func @transform_7(%arg0: i32) -> (i32, i32) {
    %c0_i32 = arith.constant 0 : i32
    %c0_i32_0 = arith.constant 0 : i32
    %c0_i32_1 = arith.constant 0 : i32
    return %c0_i32, %c0_i32_0 : i32, i32
  }
  func.func @transform_8(%arg0: i32) -> (i32, i32) {
    %c0_i32 = arith.constant 0 : i32
    %c0_i32_0 = arith.constant 0 : i32
    %c0_i32_1 = arith.constant 0 : i32
    return %c0_i32, %c0_i32_0 : i32, i32
  }
  func.func @transform_9(%arg0: i32) -> (i32, i32) {
    %c0_i32 = arith.constant 0 : i32
    %c0_i32_0 = arith.constant 0 : i32
    %c0_i32_1 = arith.constant 0 : i32
    return %c0_i32, %c0_i32_0 : i32, i32
  }
  func.func @transform_10(%arg0: i32) -> (i32, i32) {
    %c0_i32 = arith.constant 0 : i32
    %c0_i32_0 = arith.constant 0 : i32
    return %arg0, %c0_i32 : i32, i32
  }
  func.func @transform_11(%arg0: i32) -> (i32, i32) {
    %c0_i32 = arith.constant 0 : i32
    %c0_i32_0 = arith.constant 0 : i32
    return %arg0, %c0_i32 : i32, i32
  }
}

module attributes {stable_mosaic.version = 11 : i64} {
  func.func @_fused_tail_kernel(%arg0: i32, %arg1: memref<16x36xf32, #tpu.memory_space<vmem>>, %arg2: memref<16x144xf32, #tpu.memory_space<vmem>>, %arg3: memref<36x16xf32, #tpu.memory_space<vmem>>, %arg4: memref<144x16xf32, #tpu.memory_space<vmem>>, %arg5: memref<1x16xf32, #tpu.memory_space<vmem>>, %arg6: memref<1x16xf32, #tpu.memory_space<vmem>>, %arg7: memref<16x16xf32, #tpu.memory_space<vmem>>) attributes {dimension_semantics = [#tpu.dimension_semantics<parallel>], iteration_bounds = array<i64: 2>, scalar_prefetch = 0 : i64, scratch_operands = 0 : i64, tpu.core_type = #tpu.core_type<tc>, window_params = [{transform_indices = @transform_0, window_bounds = array<i64: 16, 36>}, {transform_indices = @transform_1, window_bounds = array<i64: 16, 144>}, {pipeline_mode = #tpu.pipeline_mode<synchronous>, transform_indices = @transform_2, window_bounds = array<i64: 36, 16>}, {pipeline_mode = #tpu.pipeline_mode<synchronous>, transform_indices = @transform_3, window_bounds = array<i64: 144, 16>}, {pipeline_mode = #tpu.pipeline_mode<synchronous>, transform_indices = @transform_4, window_bounds = array<i64: 1, 16>}, {pipeline_mode = #tpu.pipeline_mode<synchronous>, transform_indices = @transform_5, window_bounds = array<i64: 1, 16>}, {transform_indices = @transform_6, window_bounds = array<i64: 16, 16>}]} {
    %c0 = arith.constant 0 : index
    %c0_0 = arith.constant 0 : index
    %0 = vector.load %arg1[%c0, %c0_0] : memref<16x36xf32, #tpu.memory_space<vmem>>, vector<16x36xf32>
    %c0_1 = arith.constant 0 : index
    %c0_2 = arith.constant 0 : index
    %1 = vector.load %arg3[%c0_1, %c0_2] : memref<36x16xf32, #tpu.memory_space<vmem>>, vector<36x16xf32>
    %cst = arith.constant dense<0.000000e+00> : vector<16x16xf32>
    %2 = tpu.matmul %0, %1, %cst {dimension_numbers = #tpu.dot_dimension_numbers<[1], [0], [0], [1], [0, 0, 1, 1], [], []>} : vector<16x36xf32>, vector<36x16xf32>, vector<16x16xf32> -> vector<16x16xf32>
    %c0_3 = arith.constant 0 : index
    %c0_4 = arith.constant 0 : index
    %3 = vector.load %arg2[%c0_3, %c0_4] : memref<16x144xf32, #tpu.memory_space<vmem>>, vector<16x144xf32>
    %c0_5 = arith.constant 0 : index
    %c0_6 = arith.constant 0 : index
    %4 = vector.load %arg4[%c0_5, %c0_6] : memref<144x16xf32, #tpu.memory_space<vmem>>, vector<144x16xf32>
    %cst_7 = arith.constant dense<0.000000e+00> : vector<16x16xf32>
    %5 = tpu.matmul %3, %4, %cst_7 {dimension_numbers = #tpu.dot_dimension_numbers<[1], [0], [0], [1], [0, 0, 1, 1], [], []>} : vector<16x144xf32>, vector<144x16xf32>, vector<16x16xf32> -> vector<16x16xf32>
    %6 = arith.addf %2, %5 : vector<16x16xf32>
    %c0_8 = arith.constant 0 : index
    %c0_9 = arith.constant 0 : index
    %7 = vector.load %arg5[%c0_8, %c0_9] : memref<1x16xf32, #tpu.memory_space<vmem>>, vector<1x16xf32>
    %8 = vector.broadcast %7 : vector<1x16xf32> to vector<16x16xf32>
    %9 = arith.mulf %6, %8 : vector<16x16xf32>
    %c0_10 = arith.constant 0 : index
    %c0_11 = arith.constant 0 : index
    %10 = vector.load %arg6[%c0_10, %c0_11] : memref<1x16xf32, #tpu.memory_space<vmem>>, vector<1x16xf32>
    %11 = vector.broadcast %10 : vector<1x16xf32> to vector<16x16xf32>
    %12 = arith.addf %9, %11 : vector<16x16xf32>
    %cst_12 = arith.constant 0.000000e+00 : f32
    %13 = vector.broadcast %cst_12 : f32 to vector<16x16xf32>
    %14 = arith.maximumf %12, %13 : vector<16x16xf32>
    %c0_13 = arith.constant 0 : index
    %c0_14 = arith.constant 0 : index
    %15 = vector.load %arg7[%c0_13, %c0_14] : memref<16x16xf32, #tpu.memory_space<vmem>>, vector<16x16xf32>
    tpu.vector_store %arg7[%c0_13, %c0_14], %14 {strides = array<i32>} : memref<16x16xf32, #tpu.memory_space<vmem>>, vector<16x16xf32>,
    return
  }
  func.func @transform_0(%arg0: i32) -> (i32, i32) {
    %c0_i32 = arith.constant 0 : i32
    %c0_i32_0 = arith.constant 0 : i32
    return %arg0, %c0_i32 : i32, i32
  }
  func.func @transform_1(%arg0: i32) -> (i32, i32) {
    %c0_i32 = arith.constant 0 : i32
    %c0_i32_0 = arith.constant 0 : i32
    return %arg0, %c0_i32 : i32, i32
  }
  func.func @transform_2(%arg0: i32) -> (i32, i32) {
    %c0_i32 = arith.constant 0 : i32
    %c0_i32_0 = arith.constant 0 : i32
    %c0_i32_1 = arith.constant 0 : i32
    return %c0_i32, %c0_i32_0 : i32, i32
  }
  func.func @transform_3(%arg0: i32) -> (i32, i32) {
    %c0_i32 = arith.constant 0 : i32
    %c0_i32_0 = arith.constant 0 : i32
    %c0_i32_1 = arith.constant 0 : i32
    return %c0_i32, %c0_i32_0 : i32, i32
  }
  func.func @transform_4(%arg0: i32) -> (i32, i32) {
    %c0_i32 = arith.constant 0 : i32
    %c0_i32_0 = arith.constant 0 : i32
    %c0_i32_1 = arith.constant 0 : i32
    return %c0_i32, %c0_i32_0 : i32, i32
  }
  func.func @transform_5(%arg0: i32) -> (i32, i32) {
    %c0_i32 = arith.constant 0 : i32
    %c0_i32_0 = arith.constant 0 : i32
    %c0_i32_1 = arith.constant 0 : i32
    return %c0_i32, %c0_i32_0 : i32, i32
  }
  func.func @transform_6(%arg0: i32) -> (i32, i32) {
    %c0_i32 = arith.constant 0 : i32
    %c0_i32_0 = arith.constant 0 : i32
    return %arg0, %c0_i32 : i32, i32
  }
}

</mosaic_0001>

<llo_original>
// kernel: stem_forward.2
$region0: #{stem_forward.2}
  #allocation0 [shape = 'u32[]', space=smem, size = 0x4, offset = 0x4, fixed_abs, tag = 'smem constant byte address 0x4 - core index']
  #allocation1 [shape = 'u32[144,128]{1,0:T(1,128)}', space=vmem, size = 0x12000, scoped, tag = 'internal scratch']
  %s0 = inlined_call_operand.vmem [shape: f32[128,36], index: 0, kind: input, shape index: {}]
  %s1 = inlined_call_operand.vmem [shape: f32[36,4], index: 1, kind: input, shape index: {}]
  %s2 = inlined_call_operand.vmem [shape: f32[1,4], index: 2, kind: input, shape index: {}]
  %s3 = inlined_call_operand.vmem [shape: f32[1,4], index: 3, kind: input, shape index: {}]
  %s4 = inlined_call_operand.vmem [shape: f32[36,4], index: 4, kind: input, shape index: {}]
  %s5 = inlined_call_operand.vmem [shape: f32[1,4], index: 5, kind: input, shape index: {}]
  %s6 = inlined_call_operand.vmem [shape: f32[1,4], index: 6, kind: input, shape index: {}]
  %s7 = inlined_call_operand.vmem [shape: f32[4,16], index: 7, kind: input, shape index: {}]
  %s8 = inlined_call_operand.vmem [shape: f32[1,16], index: 8, kind: input, shape index: {}]
  %s9 = inlined_call_operand.vmem [shape: f32[1,16], index: 9, kind: input, shape index: {}]
  %s10 = inlined_call_operand.vmem [shape: f32[128,4], index: 10, kind: output, shape index: {0}]
  %s11 = inlined_call_operand.vmem [shape: f32[128,16], index: 11, kind: output, shape index: {1}]
  %12 = xla_tuple %s10, %s11
  %s13 = sld [smem:[#allocation0]]
  $region81: #{stem_forward.2} parent=0
    _
  %s15 = ssub.s32 1, %s13
  %s16 = scalar_select 0, %s15, %s13
  loop: start=0, step=1, limit=4
  $region2: #{stem_forward.2} parent=0 // loop_pre_header
    _
  $region3: #{stem_forward.2} parent=0 // loop_header
    %s18 = sphi 0, %s22
    %p19 = scmp.ge.s32.totalorder %s18, 4
    %s28 = sphi 0, %s30
    %s31 = sphi 0, %s28
    %s32 = sphi 0, %s31
    %s48 = sphi 0, %s32
    %s52 = sphi 0, %s52
    %s54 = sphi 0, %s52
    %s55 = sphi 0, %s54
    %s69 = sphi 0, %s55
    %s73 = sphi 0, %s73
    %s75 = sphi 0, %s73
    %s76 = sphi 0, %s75
    %s90 = sphi 0, %s76
    %s94 = sphi 0, %s94
    %s96 = sphi 0, %s94
    %s97 = sphi 0, %s96
    %s111 = sphi 0, %s97
    %s115 = sphi 0, %s115
    %s117 = sphi 0, %s115
    %s118 = sphi 0, %s117
    %s132 = sphi 0, %s118
    %s136 = sphi 0, %s136
    %s138 = sphi 0, %s136
    %s139 = sphi 0, %s138
    %s153 = sphi 0, %s139
    %s157 = sphi 0, %s157
    %s159 = sphi 0, %s157
    %s160 = sphi 0, %s159
    %s174 = sphi 0, %s160
    %s178 = sphi 0, %s178
    %s180 = sphi 0, %s178
    %s181 = sphi 0, %s180
    %s195 = sphi 0, %s181
    %s199 = sphi 0, %s199
    %s201 = sphi 0, %s199
    %s202 = sphi 0, %s201
    %s216 = sphi 0, %s202
    %s220 = sphi 0, %s220
    %s222 = sphi 0, %s220
    %s223 = sphi 0, %s222
    %s237 = sphi 0, %s223
    %s243 = sphi 0, %s245
    %s246 = sphi 0, %s243
    %s247 = sphi 0, %s246
    %s263 = sphi 0, %s247
    %s269 = sphi 0, %s271
    %s272 = sphi 0, %s269
    %s273 = sphi 0, %s272
    %s289 = sphi 0, %s273
  $region4: #{stem_forward.2} parent=0 // loop_header_branch
    %21 = sbr.rel (%p19) target = $region8
  $region5: #{stem_forward.2} parent=0 // loop_body
    %s23 = ssub.s32 %s18, 1
    %s24 = ssub.s32 %s18, 2
    %s25 = sadd.s32 %s18, 1
    %s26 = ssub.s32 %s18, %s25
    %p27 = scmp.eq.s32.totalorder %s26, 0
    %s29 = sadd.s32 %s28, 1
    %s30 = scalar_select %p27, %s28, %s29
    %p33 = pneg %p27
    %p34 = scmp.eq.s32.totalorder %s18, 1
    %p35 = por %p33, %p34
    %p36 = scmp.ne.s32.totalorder %s28, %s31
    %p37 = scmp.eq.s32.totalorder %s18, 0
    %p38 = por %p36, %p37
    %p39 = scmp.ne.s32.totalorder %s28, %s31
    %p40 = scmp.eq.s32.totalorder %s23, 1
    %p41 = por %p39, %p40
    %p42 = scmp.ne.s32.totalorder %s31, %s32
    %p43 = scmp.eq.s32.totalorder %s23, 0
    %p44 = por %p42, %p43
    %p45 = scmp.ne.s32.totalorder %s31, %s32
    %p46 = scmp.eq.s32.totalorder %s24, 1
    %p47 = por %p45, %p46
    %p49 = scmp.ne.s32.totalorder %s32, %s48
    %p50 = scmp.eq.s32.totalorder %s24, 0
    %p51 = por %p49, %p50
    %s53 = sadd.s32 %s52, 1
    %p56 = scmp.eq.s32.totalorder %s18, 1
    %p57 = scmp.ne.s32.totalorder %s52, %s54
    %p58 = scmp.eq.s32.totalorder %s18, 0
    %p59 = por %p57, %p58
    %p60 = scmp.ne.s32.totalorder %s52, %s54
    %p61 = scmp.eq.s32.totalorder %s23, 1
    %p62 = por %p60, %p61
    %p63 = scmp.ne.s32.totalorder %s54, %s55
    %p64 = scmp.eq.s32.totalorder %s23, 0
    %p65 = por %p63, %p64
    %p66 = scmp.ne.s32.totalorder %s54, %s55
    %p67 = scmp.eq.s32.totalorder %s24, 1
    %p68 = por %p66, %p67
    %p70 = scmp.ne.s32.totalorder %s55, %s69
    %p71 = scmp.eq.s32.totalorder %s24, 0
    %p72 = por %p70, %p71
    %s74 = sadd.s32 %s73, 1
    %p77 = scmp.eq.s32.totalorder %s18, 1
    %p78 = scmp.ne.s32.totalorder %s73, %s75
    %p79 = scmp.eq.s32.totalorder %s18, 0
    %p80 = por %p78, %p79
    %p81 = scmp.ne.s32.totalorder %s73, %s75
    %p82 = scmp.eq.s32.totalorder %s23, 1
    %p83 = por %p81, %p82
    %p84 = scmp.ne.s32.totalorder %s75, %s76
    %p85 = scmp.eq.s32.totalorder %s23, 0
    %p86 = por %p84, %p85
    %p87 = scmp.ne.s32.totalorder %s75, %s76
    %p88 = scmp.eq.s32.totalorder %s24, 1
    %p89 = por %p87, %p88
    %p91 = scmp.ne.s32.totalorder %s76, %s90
    %p92 = scmp.eq.s32.totalorder %s24, 0
    %p93 = por %p91, %p92
    %s95 = sadd.s32 %s94, 1
    %p98 = scmp.eq.s32.totalorder %s18, 1
    %p99 = scmp.ne.s32.totalorder %s94, %s96
    %p100 = scmp.eq.s32.totalorder %s18, 0
    %p101 = por %p99, %p100
    %p102 = scmp.ne.s32.totalorder %s94, %s96
    %p103 = scmp.eq.s32.totalorder %s23, 1
    %p104 = por %p102, %p103
    %p105 = scmp.ne.s32.totalorder %s96, %s97
    %p106 = scmp.eq.s32.totalorder %s23, 0
    %p107 = por %p105, %p106
    %p108 = scmp.ne.s32.totalorder %s96, %s97
    %p109 = scmp.eq.s32.totalorder %s24, 1
    %p110 = por %p108, %p109
    %p112 = scmp.ne.s32.totalorder %s97, %s111
    %p113 = scmp.eq.s32.totalorder %s24, 0
    %p114 = por %p112, %p113
    %s116 = sadd.s32 %s115, 1
    %p119 = scmp.eq.s32.totalorder %s18, 1
    %p120 = scmp.ne.s32.totalorder %s115, %s117
    %p121 = scmp.eq.s32.totalorder %s18, 0
    %p122 = por %p120, %p121
    %p123 = scmp.ne.s32.totalorder %s115, %s117
    %p124 = scmp.eq.s32.totalorder %s23, 1
    %p125 = por %p123, %p124
    %p126 = scmp.ne.s32.totalorder %s117, %s118
    %p127 = scmp.eq.s32.totalorder %s23, 0
    %p128 = por %p126, %p127
    %p129 = scmp.ne.s32.totalorder %s117, %s118
    %p130 = scmp.eq.s32.totalorder %s24, 1
    %p131 = por %p129, %p130
    %p133 = scmp.ne.s32.totalorder %s118, %s132
    %p134 = scmp.eq.s32.totalorder %s24, 0
    %p135 = por %p133, %p134
    %s137 = sadd.s32 %s136, 1
    %p140 = scmp.eq.s32.totalorder %s18, 1
    %p141 = scmp.ne.s32.totalorder %s136, %s138
    %p142 = scmp.eq.s32.totalorder %s18, 0
    %p143 = por %p141, %p142
    %p144 = scmp.ne.s32.totalorder %s136, %s138
    %p145 = scmp.eq.s32.totalorder %s23, 1
    %p146 = por %p144, %p145
    %p147 = scmp.ne.s32.totalorder %s138, %s139
    %p148 = scmp.eq.s32.totalorder %s23, 0
    %p149 = por %p147, %p148
    %p150 = scmp.ne.s32.totalorder %s138, %s139
    %p151 = scmp.eq.s32.totalorder %s24, 1
    %p152 = por %p150, %p151
    %p154 = scmp.ne.s32.totalorder %s139, %s153
    %p155 = scmp.eq.s32.totalorder %s24, 0
    %p156 = por %p154, %p155
    %s158 = sadd.s32 %s157, 1
    %p161 = scmp.eq.s32.totalorder %s18, 1
    %p162 = scmp.ne.s32.totalorder %s157, %s159
    %p163 = scmp.eq.s32.totalorder %s18, 0
    %p164 = por %p162, %p163
    %p165 = scmp.ne.s32.totalorder %s157, %s159
    %p166 = scmp.eq.s32.totalorder %s23, 1
    %p167 = por %p165, %p166
    %p168 = scmp.ne.s32.totalorder %s159, %s160
    %p169 = scmp.eq.s32.totalorder %s23, 0
    %p170 = por %p168, %p169
    %p171 = scmp.ne.s32.totalorder %s159, %s160
    %p172 = scmp.eq.s32.totalorder %s24, 1
    %p173 = por %p171, %p172
    %p175 = scmp.ne.s32.totalorder %s160, %s174
    %p176 = scmp.eq.s32.totalorder %s24, 0
    %p177 = por %p175, %p176
    %s179 = sadd.s32 %s178, 1
    %p182 = scmp.eq.s32.totalorder %s18, 1
    %p183 = scmp.ne.s32.totalorder %s178, %s180
    %p184 = scmp.eq.s32.totalorder %s18, 0
    %p185 = por %p183, %p184
    %p186 = scmp.ne.s32.totalorder %s178, %s180
    %p187 = scmp.eq.s32.totalorder %s23, 1
    %p188 = por %p186, %p187
    %p189 = scmp.ne.s32.totalorder %s180, %s181
    %p190 = scmp.eq.s32.totalorder %s23, 0
    %p191 = por %p189, %p190
    %p192 = scmp.ne.s32.totalorder %s180, %s181
    %p193 = scmp.eq.s32.totalorder %s24, 1
    %p194 = por %p192, %p193
    %p196 = scmp.ne.s32.totalorder %s181, %s195
    %p197 = scmp.eq.s32.totalorder %s24, 0
    %p198 = por %p196, %p197
    %s200 = sadd.s32 %s199, 1
    %p203 = scmp.eq.s32.totalorder %s18, 1
    %p204 = scmp.ne.s32.totalorder %s199, %s201
    %p205 = scmp.eq.s32.totalorder %s18, 0
    %p206 = por %p204, %p205
    %p207 = scmp.ne.s32.totalorder %s199, %s201
    %p208 = scmp.eq.s32.totalorder %s23, 1
    %p209 = por %p207, %p208
    %p210 = scmp.ne.s32.totalorder %s201, %s202
    %p211 = scmp.eq.s32.totalorder %s23, 0
    %p212 = por %p210, %p211
    %p213 = scmp.ne.s32.totalorder %s201, %s202
    %p214 = scmp.eq.s32.totalorder %s24, 1
    %p215 = por %p213, %p214
    %p217 = scmp.ne.s32.totalorder %s202, %s216
    %p218 = scmp.eq.s32.totalorder %s24, 0
    %p219 = por %p217, %p218
    %s221 = sadd.s32 %s220, 1
    %p224 = scmp.eq.s32.totalorder %s18, 1
    %p225 = scmp.ne.s32.totalorder %s220, %s222
    %p226 = scmp.eq.s32.totalorder %s18, 0
    %p227 = por %p225, %p226
    %p228 = scmp.ne.s32.totalorder %s220, %s222
    %p229 = scmp.eq.s32.totalorder %s23, 1
    %p230 = por %p228, %p229
    %p231 = scmp.ne.s32.totalorder %s222, %s223
    %p232 = scmp.eq.s32.totalorder %s23, 0
    %p233 = por %p231, %p232
    %p234 = scmp.ne.s32.totalorder %s222, %s223
    %p235 = scmp.eq.s32.totalorder %s24, 1
    %p236 = por %p234, %p235
    %p238 = scmp.ne.s32.totalorder %s223, %s237
    %p239 = scmp.eq.s32.totalorder %s24, 0
    %p240 = por %p238, %p239
    %s241 = ssub.s32 %s18, %s25
    %p242 = scmp.eq.s32.totalorder %s241, 0
    %s244 = sadd.s32 %s243, 1
    %s245 = scalar_select %p242, %s243, %s244
    %p248 = pneg %p242
    %p249 = scmp.eq.s32.totalorder %s18, 1
    %p250 = por %p248, %p249
    %p251 = scmp.ne.s32.totalorder %s243, %s246
    %p252 = scmp.eq.s32.totalorder %s18, 0
    %p253 = por %p251, %p252
    %p254 = scmp.ne.s32.totalorder %s243, %s246
    %p255 = scmp.eq.s32.totalorder %s23, 1
    %p256 = por %p254, %p255
    %p257 = scmp.ne.s32.totalorder %s246, %s247
    %p258 = scmp.eq.s32.totalorder %s23, 0
    %p259 = por %p257, %p258
    %p260 = scmp.ne.s32.totalorder %s246, %s247
    %p261 = scmp.eq.s32.totalorder %s24, 1
    %p262 = por %p260, %p261
    %p264 = scmp.ne.s32.totalorder %s247, %s263
    %p265 = scmp.eq.s32.totalorder %s24, 0
    %p266 = por %p264, %p265
    %s267 = ssub.s32 %s18, %s25
    %p268 = scmp.eq.s32.totalorder %s267, 0
    %s270 = sadd.s32 %s269, 1
    %s271 = scalar_select %p268, %s269, %s270
    %p274 = pneg %p268
    %p275 = scmp.eq.s32.totalorder %s18, 1
    %p276 = por %p274, %p275
    %p277 = scmp.ne.s32.totalorder %s269, %s272
    %p278 = scmp.eq.s32.totalorder %s18, 0
    %p279 = por %p277, %p278
    %p280 = scmp.ne.s32.totalorder %s269, %s272
    %p281 = scmp.eq.s32.totalorder %s23, 1
    %p282 = por %p280, %p281
    %p283 = scmp.ne.s32.totalorder %s272, %s273
    %p284 = scmp.eq.s32.totalorder %s23, 0
    %p285 = por %p283, %p284
    %p286 = scmp.ne.s32.totalorder %s272, %s273
    %p287 = scmp.eq.s32.totalorder %s24, 1
    %p288 = por %p286, %p287
    %p290 = scmp.ne.s32.totalorder %s273, %s289
    %p291 = scmp.eq.s32.totalorder %s24, 0
    %p292 = por %p290, %p291
    %p293 = scmp.le.s32.totalorder 1, %s18
    %p294 = scmp.lt.s32.totalorder %s18, 3
    %p295 = pnand %p293, %p294
    %p296 = pneg %p295
    // Predicated region
    $region9: #{stem_forward.2} parent=5 // pred_check
      _
    $region10: #{stem_forward.2} parent=5 // pred_check_branch
      %298 = sbr.rel (%p295) target = $region12
    $region11: #{stem_forward.2} parent=5 // pred_region
      %s299 = ssub.s32 %s18, 1
      // Predicated region
      $region13: #{stem_forward.2} parent=11 // pred_check
        %p300 = pneg %p65
      $region14: #{stem_forward.2} parent=11 // pred_check_branch
        %302 = sbr.rel (%p300) target = $region16
      $region15: #{stem_forward.2} parent=11 // pred_region
        _
      $region16: #{stem_forward.2} parent=11 // pred_fallthru
        _
      // Predicated region
      $region17: #{stem_forward.2} parent=11 // pred_check
        %p303 = pneg %p86
      $region18: #{stem_forward.2} parent=11 // pred_check_branch
        %305 = sbr.rel (%p303) target = $region20
      $region19: #{stem_forward.2} parent=11 // pred_region
        _
      $region20: #{stem_forward.2} parent=11 // pred_fallthru
        _
      // Predicated region
      $region21: #{stem_forward.2} parent=11 // pred_check
        %p306 = pneg %p107
      $region22: #{stem_forward.2} parent=11 // pred_check_branch
        %308 = sbr.rel (%p306) target = $region24
      $region23: #{stem_forward.2} parent=11 // pred_region
        _
      $region24: #{stem_forward.2} parent=11 // pred_fallthru
        _
      // Predicated region
      $region25: #{stem_forward.2} parent=11 // pred_check
        %p309 = pneg %p128
      $region26: #{stem_forward.2} parent=11 // pred_check_branch
        %311 = sbr.rel (%p309) target = $region28
      $region27: #{stem_forward.2} parent=11 // pred_region
        _
      $region28: #{stem_forward.2} parent=11 // pred_fallthru
        _
      // Predicated region
      $region29: #{stem_forward.2} parent=11 // pred_check
        %p312 = pneg %p149
      $region30: #{stem_forward.2} parent=11 // pred_check_branch
        %314 = sbr.rel (%p312) target = $region32
      $region31: #{stem_forward.2} parent=11 // pred_region
        _
      $region32: #{stem_forward.2} parent=11 // pred_fallthru
        _
      // Predicated region
      $region33: #{stem_forward.2} parent=11 // pred_check
        %p315 = pneg %p170
      $region34: #{stem_forward.2} parent=11 // pred_check_branch
        %317 = sbr.rel (%p315) target = $region36
      $region35: #{stem_forward.2} parent=11 // pred_region
        _
      $region36: #{stem_forward.2} parent=11 // pred_fallthru
        _
      // Predicated region
      $region37: #{stem_forward.2} parent=11 // pred_check
        %p318 = pneg %p191
      $region38: #{stem_forward.2} parent=11 // pred_check_branch
        %320 = sbr.rel (%p318) target = $region40
      $region39: #{stem_forward.2} parent=11 // pred_region
        _
      $region40: #{stem_forward.2} parent=11 // pred_fallthru
        _
      // Predicated region
      $region41: #{stem_forward.2} parent=11 // pred_check
        %p321 = pneg %p212
      $region42: #{stem_forward.2} parent=11 // pred_check_branch
        %323 = sbr.rel (%p321) target = $region44
      $region43: #{stem_forward.2} parent=11 // pred_region
        _
      $region44: #{stem_forward.2} parent=11 // pred_fallthru
        _
      // Predicated region
      $region45: #{stem_forward.2} parent=11 // pred_check
        %p324 = pneg %p233
      $region46: #{stem_forward.2} parent=11 // pred_check_branch
        %326 = sbr.rel (%p324) target = $region48
      $region47: #{stem_forward.2} parent=11 // pred_region
        _
      $region48: #{stem_forward.2} parent=11 // pred_fallthru
        _
    $region12: #{stem_forward.2} parent=5 // pred_fallthru
      _
    %p327 = scmp.lt.s32.totalorder %s18, 2
    // Predicated region
    $region49: #{stem_forward.2} parent=5 // pred_check
      %p328 = pneg %p327
    $region50: #{stem_forward.2} parent=5 // pred_check_branch
      %330 = sbr.rel (%p328) target = $region52
    $region51: #{stem_forward.2} parent=5 // pred_region
      // Predicated region
      $region53: #{stem_forward.2} parent=51 // pred_check
        %p331 = pneg %p38
      $region54: #{stem_forward.2} parent=51 // pred_check_branch
        %333 = sbr.rel (%p331) target = $region56
      $region55: #{stem_forward.2} parent=51 // pred_region
        %s334 = smul.u32 8, %s18
        %p335 = scmp.lt.s32.totalorder %s334, 15
        %s336 = scalar_select %p335, %s334, 15
        %s337 = smul.addr %s336, 8
        %s338 = scalar_lea.vmem %s0, %s337
        %s339 = smul.u32 8, %s18
      $region56: #{stem_forward.2} parent=51 // pred_fallthru
        _
    $region52: #{stem_forward.2} parent=5 // pred_fallthru
      _
    %p340 = scmp.le.s32.totalorder 1, %s18
    %p341 = scmp.lt.s32.totalorder %s18, 3
    %p342 = pnand %p340, %p341
    %p343 = pneg %p342
    // Predicated region
    $region57: #{stem_forward.2} parent=5 // pred_check
      _
    $region58: #{stem_forward.2} parent=5 // pred_check_branch
      %345 = sbr.rel (%p342) target = $region60
    $region59: #{stem_forward.2} parent=5 // pred_region
      %s346 = ssub.s32 %s18, 1
      %s347 = smul.u32 8, %s23
      %p348 = scmp.lt.s32.totalorder %s347, 15
      %s349 = scalar_select %p348, %s347, 15
      %s350 = smul.addr %s349, 8
      %s351 = scalar_lea.vmem %s0, %s350
      %p352 = pneg %p44
      %p353 = pneg %p41
      %p354 = pneg %p65
      %p355 = pneg %p62
      %p356 = pneg %p86
      %p357 = pneg %p83
      %p358 = pneg %p107
      %p359 = pneg %p104
      %p360 = pneg %p128
      %p361 = pneg %p125
      %p362 = pneg %p149
      %p363 = pneg %p146
      %p364 = pneg %p170
      %p365 = pneg %p167
      %p366 = pneg %p191
      %p367 = pneg %p188
      %p368 = pneg %p212
      %p369 = pneg %p209
      %p370 = pneg %p233
      %p371 = pneg %p230
      %p372 = pneg %p259
      %p373 = pneg %p256
      %s374 = smul.u32 8, %s23
      %p375 = scmp.lt.s32.totalorder %s374, 15
      %s376 = scalar_select %p375, %s374, 15
      %s377 = smul.addr %s376, 8
      %s378 = scalar_lea.vmem %s10, %s377
      %p379 = pneg %p285
      %p380 = pneg %p282
      %s381 = smul.u32 8, %s23
      %p382 = scmp.lt.s32.totalorder %s381, 15
      %s383 = scalar_select %p382, %s381, 15
      %s384 = smul.addr %s383, 8
      %s385 = scalar_lea.vmem %s11, %s384
      %s386 = smul.u32 8, %s23
      %p387 = scmp.lt.s32.totalorder %s386, 15
      %s388 = scalar_select %p387, %s386, 15
      %s389 = smul.addr %s388, 8
      %s390 = scalar_lea.vmem %s0, %s389
      %s391 = smul.u32 8, %s23
      %s392 = smul.u32 8, %s23
      %p393 = scmp.lt.s32.totalorder %s392, 15
      %s394 = scalar_select %p393, %s392, 15
      %s395 = smul.addr %s394, 8
      %s396 = scalar_lea.vmem %s10, %s395
      %s397 = smul.u32 8, %s23
      %s398 = smul.u32 8, %s23
      %p399 = scmp.lt.s32.totalorder %s398, 15
      %s400 = scalar_select %p399, %s398, 15
      %s401 = smul.addr %s400, 8
      %s402 = scalar_lea.vmem %s11, %s401
      %s403 = smul.u32 8, %s23
      %v404 = vld [vmem:[%s390] sm:$0xff]
      %v405 = vld [vmem:[%s390 + $0x8] sm:$0xff]
      %v406 = vld [vmem:[%s390 + $0x10] sm:$0xff]
      %v407 = vld [vmem:[%s390 + $0x18] sm:$0xff]
      %v408 = vld [vmem:[%s390 + $0x20] sm:$0xff]
      %v409 = vld [vmem:[%s390 + $0x28] sm:$0xff]
      %v410 = vld [vmem:[%s390 + $0x30] sm:$0xff]
      %v411 = vld [vmem:[%s390 + $0x38] sm:$0xff]
      %v412 = vld [vmem:[%s1] sm:$0xff]
      %v413 = vld [vmem:[%s1 + $0x8] sm:$0xff]
      %v414 = vld [vmem:[%s1 + $0x10] sm:$0xff]
      %v415 = vld [vmem:[%s1 + $0x18] sm:$0xff]
      %v416 = vld [vmem:[%s1 + $0x20] sm:$0xf]
      %vm417 = vcmask 293888
      %v419 = vsel %vm417, %v404, 0
      %v422 = vsel %vm417, %v405, 0
      %v425 = vsel %vm417, %v406, 0
      %v428 = vsel %vm417, %v407, 0
      %v431 = vsel %vm417, %v408, 0
      %v434 = vsel %vm417, %v409, 0
      %v437 = vsel %vm417, %v410, 0
      %v440 = vsel %vm417, %v411, 0
      %vm442 = vcmask 1043456
      %v444 = vsel %vm442, %v416, 0
      %446 = vmatprep.subr.mxu0 0.0
      %447 = vmatpush1.msra.mxu0 %v412
      %448 = vmatprep.subr.mxu0 0.0
      %449 = vmatpush1.msra.mxu0 %v413
      %450 = vmatprep.subr.mxu0 0.0
      %451 = vmatpush1.msra.mxu0 %v414
      %452 = vmatprep.subr.mxu0 0.0
      %453 = vmatpush1.msra.mxu0 %v415
      %454 = vmatprep.subr.mxu0 0.0
      %455 = vmatpush1.msra.mxu0 %v444
      %456 = vmatprep.subr.mxu0 0.0
      %457 = vmatpush1.msra.mxu0 0.0
      %458 = vmatprep.subr.mxu0 0.0
      %459 = vmatpush1.msra.mxu0 0.0
      %460 = vmatprep.subr.mxu0 0.0
      %461 = vmatpush1.msra.mxu0 0.0
      %462 = vmatprep.subr.mxu0 0.0
      %463 = vmatpush1.msra.mxu0 0.0
      %464 = vmatprep.subr.mxu0 0.0
      %465 = vmatpush1.msra.mxu0 0.0
      %466 = vmatprep.subr.mxu0 0.0
      %467 = vmatpush1.msra.mxu0 0.0
      %468 = vmatprep.subr.mxu0 0.0
      %469 = vmatpush1.msra.mxu0 0.0
      %470 = vmatprep.subr.mxu0 0.0
      %471 = vmatpush1.msra.mxu0 0.0
      %472 = vmatprep.subr.mxu0 0.0
      %473 = vmatpush1.msra.mxu0 0.0
      %474 = vmatprep.subr.mxu0 0.0
      %475 = vmatpush1.msra.mxu0 0.0
      %476 = vmatprep.subr.mxu0 0.0
      %477 = vmatpush1.msra.mxu0 0.0
      %478 = vmatprep.subr.mxu0 0.0
      %479 = vmatpush1.msra.mxu0 0.0
      %480 = vmatprep.subr.mxu0 0.0
      %481 = vmatpush1.msra.mxu0 0.0
      %482 = vmatprep.subr.mxu0 0.0
      %483 = vmatpush1.msra.mxu0 0.0
      %484 = vmatprep.subr.mxu0 0.0
      %485 = vmatpush1.msra.mxu0 0.0
      %486 = vmatprep.subr.mxu0 0.0
      %487 = vmatpush1.msra.mxu0 0.0
      %488 = vmatprep.subr.mxu0 0.0
      %489 = vmatpush1.msra.mxu0 0.0
      %490 = vmatprep.subr.mxu0 0.0
      %491 = vmatpush1.msra.mxu0 0.0
      %492 = vmatprep.subr.mxu0 0.0
      %493 = vmatpush1.msra.mxu0 0.0
      %494 = vmatprep.subr.mxu0 0.0
      %495 = vmatpush1.msra.mxu0 0.0
      %496 = vmatprep.subr.mxu0 0.0
      %497 = vmatpush1.msra.mxu0 0.0
      %498 = vmatprep.subr.mxu0 0.0
      %499 = vmatpush1.msra.mxu0 0.0
      %500 = vmatprep.subr.mxu0 0.0
      %501 = vmatpush1.msra.mxu0 0.0
      %502 = vmatprep.subr.mxu0 0.0
      %503 = vmatpush1.msra.mxu0 0.0
      %504 = vmatprep.subr.mxu0 0.0
      %505 = vmatpush1.msra.mxu0 0.0
      %506 = vmatprep.subr.mxu0 0.0
      %507 = vmatpush1.msra.mxu0 0.0
      %508 = vmatprep.subr.mxu0 0.0
      %509 = vmatpush1.msra.mxu0 0.0
      %510 = vmatprep.mubr.f32.mxu0 0.0
      %511 = vmatmul.mubr.f32.gmra.mrb[0].mxu0 %v419
      %v512 = vpop.f32.mrb[0].mxu0
      %v513 = vadd.f32 0.0, %v512
      %v514 = vpop.f32.mrb[0].mxu0
      %515 = vmatprep.mubr.f32.mxu0 0.0
      %516 = vmatmul.mubr.f32.gmra.mrb[0].mxu0 %v422
      %v517 = vpop.f32.mrb[0].mxu0
      %v518 = vadd.f32 0.0, %v517
      %v519 = vpop.f32.mrb[0].mxu0
      %520 = vmatprep.mubr.f32.mxu0 0.0
      %521 = vmatmul.mubr.f32.gmra.mrb[0].mxu0 %v425
      %v522 = vpop.f32.mrb[0].mxu0
      %v523 = vadd.f32 0.0, %v522
      %v524 = vpop.f32.mrb[0].mxu0
      %525 = vmatprep.mubr.f32.mxu0 0.0
      %526 = vmatmul.mubr.f32.gmra.mrb[0].mxu0 %v428
      %v527 = vpop.f32.mrb[0].mxu0
      %v528 = vadd.f32 0.0, %v527
      %v529 = vpop.f32.mrb[0].mxu0
      %530 = vmatprep.mubr.f32.mxu0 0.0
      %531 = vmatmul.mubr.f32.gmra.mrb[0].mxu0 %v431
      %v532 = vpop.f32.mrb[0].mxu0
      %v533 = vadd.f32 0.0, %v532
      %v534 = vpop.f32.mrb[0].mxu0
      %535 = vmatprep.mubr.f32.mxu0 0.0
      %536 = vmatmul.mubr.f32.gmra.mrb[0].mxu0 %v434
      %v537 = vpop.f32.mrb[0].mxu0
      %v538 = vadd.f32 0.0, %v537
      %v539 = vpop.f32.mrb[0].mxu0
      %540 = vmatprep.mubr.f32.mxu0 0.0
      %541 = vmatmul.mubr.f32.gmra.mrb[0].mxu0 %v437
      %v542 = vpop.f32.mrb[0].mxu0
      %v543 = vadd.f32 0.0, %v542
      %v544 = vpop.f32.mrb[0].mxu0
      %545 = vmatprep.mubr.f32.mxu0 0.0
      %546 = vmatmul.mubr.f32.gmra.mrb[0].mxu0 %v440
      %v547 = vpop.f32.mrb[0].mxu0
      %v548 = vadd.f32 0.0, %v547
      %v549 = vpop.f32.mrb[0].mxu0
      %550 = vdwg.mxu0
      %v551 = vld [vmem:[%s2] sm:$0x1]
      %v553 = vlaneseq
      %v554 = vshrl.u32 %v553, 7
      %v555 = vsub.s32 0, %v554
      %v556 = vrot.slane %v551, %v555
      %v558 = vmul.f32 %v513, %v556
      %v559 = vmul.f32 %v518, %v556
      %v560 = vmul.f32 %v523, %v556
      %v561 = vmul.f32 %v528, %v556
      %v562 = vmul.f32 %v533, %v556
      %v563 = vmul.f32 %v538, %v556
      %v564 = vmul.f32 %v543, %v556
      %v565 = vmul.f32 %v548, %v556
      %v566 = vld [vmem:[%s3] sm:$0x1]
      %v568 = vlaneseq
      %v569 = vshrl.u32 %v568, 7
      %v570 = vsub.s32 0, %v569
      %v571 = vrot.slane %v566, %v570
      %v573 = vadd.f32 %v558, %v571
      %v574 = vadd.f32 %v559, %v571
      %v575 = vadd.f32 %v560, %v571
      %v576 = vadd.f32 %v561, %v571
      %v577 = vadd.f32 %v562, %v571
      %v578 = vadd.f32 %v563, %v571
      %v579 = vadd.f32 %v564, %v571
      %v580 = vadd.f32 %v565, %v571
      %v581 = vmax.f32 %v573, 0.0
      %v582 = vmax.f32 %v574, 0.0
      %v583 = vmax.f32 %v575, 0.0
      %v584 = vmax.f32 %v576, 0.0
      %v585 = vmax.f32 %v577, 0.0
      %v586 = vmax.f32 %v578, 0.0
      %v587 = vmax.f32 %v579, 0.0
      %v588 = vmax.f32 %v580, 0.0
      %vm589 = vcmask 31744
      %590 = vst.msk [vmem:[%s396] sm:$0xff] %vm589, %v581
      %591 = vst.msk [vmem:[%s396 + $0x8] sm:$0xff] %vm589, %v582
      %592 = vst.msk [vmem:[%s396 + $0x10] sm:$0xff] %vm589, %v583
      %593 = vst.msk [vmem:[%s396 + $0x18] sm:$0xff] %vm589, %v584
      %594 = vst.msk [vmem:[%s396 + $0x20] sm:$0xff] %vm589, %v585
      %595 = vst.msk [vmem:[%s396 + $0x28] sm:$0xff] %vm589, %v586
      %596 = vst.msk [vmem:[%s396 + $0x30] sm:$0xff] %vm589, %v587
      %597 = vst.msk [vmem:[%s396 + $0x38] sm:$0xff] %vm589, %v588
      %v598 = vld [vmem:[%s4] sm:$0xff]
      %v599 = vld [vmem:[%s4 + $0x8] sm:$0xff]
      %v600 = vld [vmem:[%s4 + $0x10] sm:$0xff]
      %v601 = vld [vmem:[%s4 + $0x18] sm:$0xff]
      %v602 = vld [vmem:[%s4 + $0x20] sm:$0xf]
      %v604 = vsel %vm442, %v602, 0
      %606 = vmatprep.subr.mxu0 0.0
      %607 = vmatpush1.msra.mxu0 %v598
      %608 = vmatprep.subr.mxu0 0.0
      %609 = vmatpush1.msra.mxu0 %v599
      %610 = vmatprep.subr.mxu0 0.0
      %611 = vmatpush1.msra.mxu0 %v600
      %612 = vmatprep.subr.mxu0 0.0
      %613 = vmatpush1.msra.mxu0 %v601
      %614 = vmatprep.subr.mxu0 0.0
      %615 = vmatpush1.msra.mxu0 %v604
      %616 = vmatprep.subr.mxu0 0.0
      %617 = vmatpush1.msra.mxu0 0.0
      %618 = vmatprep.subr.mxu0 0.0
      %619 = vmatpush1.msra.mxu0 0.0
      %620 = vmatprep.subr.mxu0 0.0
      %621 = vmatpush1.msra.mxu0 0.0
      %622 = vmatprep.subr.mxu0 0.0
      %623 = vmatpush1.msra.mxu0 0.0
      %624 = vmatprep.subr.mxu0 0.0
      %625 = vmatpush1.msra.mxu0 0.0
      %626 = vmatprep.subr.mxu0 0.0
      %627 = vmatpush1.msra.mxu0 0.0
      %628 = vmatprep.subr.mxu0 0.0
      %629 = vmatpush1.msra.mxu0 0.0
      %630 = vmatprep.subr.mxu0 0.0
      %631 = vmatpush1.msra.mxu0 0.0
      %632 = vmatprep.subr.mxu0 0.0
      %633 = vmatpush1.msra.mxu0 0.0
      %634 = vmatprep.subr.mxu0 0.0
      %635 = vmatpush1.msra.mxu0 0.0
      %636 = vmatprep.subr.mxu0 0.0
      %637 = vmatpush1.msra.mxu0 0.0
      %638 = vmatprep.subr.mxu0 0.0
      %639 = vmatpush1.msra.mxu0 0.0
      %640 = vmatprep.subr.mxu0 0.0
      %641 = vmatpush1.msra.mxu0 0.0
      %642 = vmatprep.subr.mxu0 0.0
      %643 = vmatpush1.msra.mxu0 0.0
      %644 = vmatprep.subr.mxu0 0.0
      %645 = vmatpush1.msra.mxu0 0.0
      %646 = vmatprep.subr.mxu0 0.0
      %647 = vmatpush1.msra.mxu0 0.0
      %648 = vmatprep.subr.mxu0 0.0
      %649 = vmatpush1.msra.mxu0 0.0
      %650 = vmatprep.subr.mxu0 0.0
      %651 = vmatpush1.msra.mxu0 0.0
      %652 = vmatprep.subr.mxu0 0.0
      %653 = vmatpush1.msra.mxu0 0.0
      %654 = vmatprep.subr.mxu0 0.0
      %655 = vmatpush1.msra.mxu0 0.0
      %656 = vmatprep.subr.mxu0 0.0
      %657 = vmatpush1.msra.mxu0 0.0
      %658 = vmatprep.subr.mxu0 0.0
      %659 = vmatpush1.msra.mxu0 0.0
      %660 = vmatprep.subr.mxu0 0.0
      %661 = vmatpush1.msra.mxu0 0.0
      %662 = vmatprep.subr.mxu0 0.0
      %663 = vmatpush1.msra.mxu0 0.0
      %664 = vmatprep.subr.mxu0 0.0
      %665 = vmatpush1.msra.mxu0 0.0
      %666 = vmatprep.subr.mxu0 0.0
      %667 = vmatpush1.msra.mxu0 0.0
      %668 = vmatprep.subr.mxu0 0.0
      %669 = vmatpush1.msra.mxu0 0.0
      %670 = vmatprep.mubr.f32.mxu0 0.0
      %671 = vmatmul.mubr.f32.gmra.mrb[0].mxu0 %v419
      %v672 = vpop.f32.mrb[0].mxu0
      %v673 = vadd.f32 0.0, %v672
      %v674 = vpop.f32.mrb[0].mxu0
      %675 = vmatprep.mubr.f32.mxu0 0.0
      %676 = vmatmul.mubr.f32.gmra.mrb[0].mxu0 %v422
      %v677 = vpop.f32.mrb[0].mxu0
      %v678 = vadd.f32 0.0, %v677
      %v679 = vpop.f32.mrb[0].mxu0
      %680 = vmatprep.mubr.f32.mxu0 0.0
      %681 = vmatmul.mubr.f32.gmra.mrb[0].mxu0 %v425
      %v682 = vpop.f32.mrb[0].mxu0
      %v683 = vadd.f32 0.0, %v682
      %v684 = vpop.f32.mrb[0].mxu0
      %685 = vmatprep.mubr.f32.mxu0 0.0
      %686 = vmatmul.mubr.f32.gmra.mrb[0].mxu0 %v428
      %v687 = vpop.f32.mrb[0].mxu0
      %v688 = vadd.f32 0.0, %v687
      %v689 = vpop.f32.mrb[0].mxu0
      %690 = vmatprep.mubr.f32.mxu0 0.0
      %691 = vmatmul.mubr.f32.gmra.mrb[0].mxu0 %v431
      %v692 = vpop.f32.mrb[0].mxu0
      %v693 = vadd.f32 0.0, %v692
      %v694 = vpop.f32.mrb[0].mxu0
      %695 = vmatprep.mubr.f32.mxu0 0.0
      %696 = vmatmul.mubr.f32.gmra.mrb[0].mxu0 %v434
      %v697 = vpop.f32.mrb[0].mxu0
      %v698 = vadd.f32 0.0, %v697
      %v699 = vpop.f32.mrb[0].mxu0
      %700 = vmatprep.mubr.f32.mxu0 0.0
      %701 = vmatmul.mubr.f32.gmra.mrb[0].mxu0 %v437
      %v702 = vpop.f32.mrb[0].mxu0
      %v703 = vadd.f32 0.0, %v702
      %v704 = vpop.f32.mrb[0].mxu0
      %705 = vmatprep.mubr.f32.mxu0 0.0
      %706 = vmatmul.mubr.f32.gmra.mrb[0].mxu0 %v440
      %v707 = vpop.f32.mrb[0].mxu0
      %v708 = vadd.f32 0.0, %v707
      %v709 = vpop.f32.mrb[0].mxu0
      %710 = vdwg.mxu0
      %v711 = vld [vmem:[%s5] sm:$0x1]
      %v713 = vlaneseq
      %v714 = vshrl.u32 %v713, 7
      %v715 = vsub.s32 0, %v714
      %v716 = vrot.slane %v711, %v715
      %v718 = vmul.f32 %v673, %v716
      %v719 = vmul.f32 %v678, %v716
      %v720 = vmul.f32 %v683, %v716
      %v721 = vmul.f32 %v688, %v716
      %v722 = vmul.f32 %v693, %v716
      %v723 = vmul.f32 %v698, %v716
      %v724 = vmul.f32 %v703, %v716
      %v725 = vmul.f32 %v708, %v716
      %v726 = vld [vmem:[%s6] sm:$0x1]
      %v728 = vlaneseq
      %v729 = vshrl.u32 %v728, 7
      %v730 = vsub.s32 0, %v729
      %v731 = vrot.slane %v726, %v730
      %v733 = vadd.f32 %v718, %v731
      %v734 = vadd.f32 %v719, %v731
      %v735 = vadd.f32 %v720, %v731
      %v736 = vadd.f32 %v721, %v731
      %v737 = vadd.f32 %v722, %v731
      %v738 = vadd.f32 %v723, %v731
      %v739 = vadd.f32 %v724, %v731
      %v740 = vadd.f32 %v725, %v731
      %v741 = vmax.f32 %v733, 0.0
      %v742 = vmax.f32 %v734, 0.0
      %v743 = vmax.f32 %v735, 0.0
      %v744 = vmax.f32 %v736, 0.0
      %v745 = vmax.f32 %v737, 0.0
      %v746 = vmax.f32 %v738, 0.0
      %v747 = vmax.f32 %v739, 0.0
      %v748 = vmax.f32 %v740, 0.0
      %v749 = vld [vmem:[%s7] sm:$0xf]
      %v751 = vsel %vm589, %v741, 0
      %v754 = vsel %vm589, %v742, 0
      %v757 = vsel %vm589, %v743, 0
      %v760 = vsel %vm589, %v744, 0
      %v763 = vsel %vm589, %v745, 0
      %v766 = vsel %vm589, %v746, 0
      %v769 = vsel %vm589, %v747, 0
      %v772 = vsel %vm589, %v748, 0
      %v775 = vsel %vm442, %v749, 0
      %777 = vmatprep.subr.mxu0 0.0
      %778 = vmatpush1.msra.mxu0 %v775
      %779 = vmatprep.subr.mxu0 0.0
      %780 = vmatpush1.msra.mxu0 0.0
      %781 = vmatprep.subr.mxu0 0.0
      %782 = vmatpush1.msra.mxu0 0.0
      %783 = vmatprep.subr.mxu0 0.0
      %784 = vmatpush1.msra.mxu0 0.0
      %785 = vmatprep.subr.mxu0 0.0
      %786 = vmatpush1.msra.mxu0 0.0
      %787 = vmatprep.subr.mxu0 0.0
      %788 = vmatpush1.msra.mxu0 0.0
      %789 = vmatprep.subr.mxu0 0.0
      %790 = vmatpush1.msra.mxu0 0.0
      %791 = vmatprep.subr.mxu0 0.0
      %792 = vmatpush1.msra.mxu0 0.0
      %793 = vmatprep.subr.mxu0 0.0
      %794 = vmatpush1.msra.mxu0 0.0
      %795 = vmatprep.subr.mxu0 0.0
      %796 = vmatpush1.msra.mxu0 0.0
      %797 = vmatprep.subr.mxu0 0.0
      %798 = vmatpush1.msra.mxu0 0.0
      %799 = vmatprep.subr.mxu0 0.0
      %800 = vmatpush1.msra.mxu0 0.0
      %801 = vmatprep.subr.mxu0 0.0
      %802 = vmatpush1.msra.mxu0 0.0
      %803 = vmatprep.subr.mxu0 0.0
      %804 = vmatpush1.msra.mxu0 0.0
      %805 = vmatprep.subr.mxu0 0.0
      %806 = vmatpush1.msra.mxu0 0.0
      %807 = vmatprep.subr.mxu0 0.0
      %808 = vmatpush1.msra.mxu0 0.0
      %809 = vmatprep.subr.mxu0 0.0
      %810 = vmatpush1.msra.mxu0 0.0
      %811 = vmatprep.subr.mxu0 0.0
      %812 = vmatpush1.msra.mxu0 0.0
      %813 = vmatprep.subr.mxu0 0.0
      %814 = vmatpush1.msra.mxu0 0.0
      %815 = vmatprep.subr.mxu0 0.0
      %816 = vmatpush1.msra.mxu0 0.0
      %817 = vmatprep.subr.mxu0 0.0
      %818 = vmatpush1.msra.mxu0 0.0
      %819 = vmatprep.subr.mxu0 0.0
      %820 = vmatpush1.msra.mxu0 0.0
      %821 = vmatprep.subr.mxu0 0.0
      %822 = vmatpush1.msra.mxu0 0.0
      %823 = vmatprep.subr.mxu0 0.0
      %824 = vmatpush1.msra.mxu0 0.0
      %825 = vmatprep.subr.mxu0 0.0
      %826 = vmatpush1.msra.mxu0 0.0
      %827 = vmatprep.subr.mxu0 0.0
      %828 = vmatpush1.msra.mxu0 0.0
      %829 = vmatprep.subr.mxu0 0.0
      %830 = vmatpush1.msra.mxu0 0.0
      %831 = vmatprep.subr.mxu0 0.0
      %832 = vmatpush1.msra.mxu0 0.0
      %833 = vmatprep.subr.mxu0 0.0
      %834 = vmatpush1.msra.mxu0 0.0
      %835 = vmatprep.subr.mxu0 0.0
      %836 = vmatpush1.msra.mxu0 0.0
      %837 = vmatprep.subr.mxu0 0.0
      %838 = vmatpush1.msra.mxu0 0.0
      %839 = vmatprep.subr.mxu0 0.0
      %840 = vmatpush1.msra.mxu0 0.0
      %841 = vmatprep.mubr.f32.mxu0 0.0
      %842 = vmatmul.mubr.f32.gmra.mrb[0].mxu0 %v751
      %v843 = vpop.f32.mrb[0].mxu0
      %v844 = vadd.f32 0.0, %v843
      %v845 = vpop.f32.mrb[0].mxu0
      %846 = vmatprep.mubr.f32.mxu0 0.0
      %847 = vmatmul.mubr.f32.gmra.mrb[0].mxu0 %v754
      %v848 = vpop.f32.mrb[0].mxu0
      %v849 = vadd.f32 0.0, %v848
      %v850 = vpop.f32.mrb[0].mxu0
      %851 = vmatprep.mubr.f32.mxu0 0.0
      %852 = vmatmul.mubr.f32.gmra.mrb[0].mxu0 %v757
      %v853 = vpop.f32.mrb[0].mxu0
      %v854 = vadd.f32 0.0, %v853
      %v855 = vpop.f32.mrb[0].mxu0
      %856 = vmatprep.mubr.f32.mxu0 0.0
      %857 = vmatmul.mubr.f32.gmra.mrb[0].mxu0 %v760
      %v858 = vpop.f32.mrb[0].mxu0
      %v859 = vadd.f32 0.0, %v858
      %v860 = vpop.f32.mrb[0].mxu0
      %861 = vmatprep.mubr.f32.mxu0 0.0
      %862 = vmatmul.mubr.f32.gmra.mrb[0].mxu0 %v763
      %v863 = vpop.f32.mrb[0].mxu0
      %v864 = vadd.f32 0.0, %v863
      %v865 = vpop.f32.mrb[0].mxu0
      %866 = vmatprep.mubr.f32.mxu0 0.0
      %867 = vmatmul.mubr.f32.gmra.mrb[0].mxu0 %v766
      %v868 = vpop.f32.mrb[0].mxu0
      %v869 = vadd.f32 0.0, %v868
      %v870 = vpop.f32.mrb[0].mxu0
      %871 = vmatprep.mubr.f32.mxu0 0.0
      %872 = vmatmul.mubr.f32.gmra.mrb[0].mxu0 %v769
      %v873 = vpop.f32.mrb[0].mxu0
      %v874 = vadd.f32 0.0, %v873
      %v875 = vpop.f32.mrb[0].mxu0
      %876 = vmatprep.mubr.f32.mxu0 0.0
      %877 = vmatmul.mubr.f32.gmra.mrb[0].mxu0 %v772
      %v878 = vpop.f32.mrb[0].mxu0
      %v879 = vadd.f32 0.0, %v878
      %v880 = vpop.f32.mrb[0].mxu0
      %881 = vdwg.mxu0
      %v882 = vld [vmem:[%s8] sm:$0x1]
      %v884 = vlaneseq
      %v885 = vshrl.u32 %v884, 7
      %v886 = vsub.s32 0, %v885
      %v887 = vrot.slane %v882, %v886
      %v889 = vmul.f32 %v844, %v887
      %v890 = vmul.f32 %v849, %v887
      %v891 = vmul.f32 %v854, %v887
      %v892 = vmul.f32 %v859, %v887
      %v893 = vmul.f32 %v864, %v887
      %v894 = vmul.f32 %v869, %v887
      %v895 = vmul.f32 %v874, %v887
      %v896 = vmul.f32 %v879, %v887
      %v897 = vld [vmem:[%s9] sm:$0x1]
      %v899 = vlaneseq
      %v900 = vshrl.u32 %v899, 7
      %v901 = vsub.s32 0, %v900
      %v902 = vrot.slane %v897, %v901
      %v904 = vadd.f32 %v889, %v902
      %v905 = vadd.f32 %v890, %v902
      %v906 = vadd.f32 %v891, %v902
      %v907 = vadd.f32 %v892, %v902
      %v908 = vadd.f32 %v893, %v902
      %v909 = vadd.f32 %v894, %v902
      %v910 = vadd.f32 %v895, %v902
      %v911 = vadd.f32 %v896, %v902
      %v912 = vmax.f32 %v904, 0.0
      %v913 = vmax.f32 %v905, 0.0
      %v914 = vmax.f32 %v906, 0.0
      %v915 = vmax.f32 %v907, 0.0
      %v916 = vmax.f32 %v908, 0.0
      %v917 = vmax.f32 %v909, 0.0
      %v918 = vmax.f32 %v910, 0.0
      %v919 = vmax.f32 %v911, 0.0
      %vm920 = vcmask 130048
      %921 = vst.msk [vmem:[%s402] sm:$0xff] %vm920, %v912
      %922 = vst.msk [vmem:[%s402 + $0x8] sm:$0xff] %vm920, %v913
      %923 = vst.msk [vmem:[%s402 + $0x10] sm:$0xff] %vm920, %v914
      %924 = vst.msk [vmem:[%s402 + $0x18] sm:$0xff] %vm920, %v915
      %925 = vst.msk [vmem:[%s402 + $0x20] sm:$0xff] %vm920, %v916
      %926 = vst.msk [vmem:[%s402 + $0x28] sm:$0xff] %vm920, %v917
      %927 = vst.msk [vmem:[%s402 + $0x30] sm:$0xff] %vm920, %v918
      %928 = vst.msk [vmem:[%s402 + $0x38] sm:$0xff] %vm920, %v919
      %s929 = smul.u32 8, %s23
      %p930 = scmp.lt.s32.totalorder %s929, 15
      %s931 = scalar_select %p930, %s929, 15
      %s932 = smul.addr %s931, 8
      %s933 = scalar_lea.vmem %s10, %s932
      %s934 = smul.u32 8, %s23
      %p935 = scmp.lt.s32.totalorder %s934, 15
      %s936 = scalar_select %p935, %s934, 15
      %s937 = smul.addr %s936, 8
      %s938 = scalar_lea.vmem %s11, %s937
      // Predicated region
      $region61: #{stem_forward.2} parent=59 // pred_check
        %p939 = pneg %p256
      $region62: #{stem_forward.2} parent=59 // pred_check_branch
        %941 = sbr.rel (%p939) target = $region64
      $region63: #{stem_forward.2} parent=59 // pred_region
        %s942 = smul.u32 8, %s23
      $region64: #{stem_forward.2} parent=59 // pred_fallthru
        _
      // Predicated region
      $region65: #{stem_forward.2} parent=59 // pred_check
        %p943 = pneg %p282
      $region66: #{stem_forward.2} parent=59 // pred_check_branch
        %945 = sbr.rel (%p943) target = $region68
      $region67: #{stem_forward.2} parent=59 // pred_region
        %s946 = smul.u32 8, %s23
      $region68: #{stem_forward.2} parent=59 // pred_fallthru
        _
    $region60: #{stem_forward.2} parent=5 // pred_fallthru
      _
    %p947 = scmp.le.s32.totalorder 2, %s18
    // Predicated region
    $region69: #{stem_forward.2} parent=5 // pred_check
      %p948 = pneg %p947
    $region70: #{stem_forward.2} parent=5 // pred_check_branch
      %950 = sbr.rel (%p948) target = $region72
    $region71: #{stem_forward.2} parent=5 // pred_region
      %s951 = ssub.s32 %s18, 2
      // Predicated region
      $region73: #{stem_forward.2} parent=71 // pred_check
        %p952 = pneg %p262
      $region74: #{stem_forward.2} parent=71 // pred_check_branch
        %954 = sbr.rel (%p952) target = $region76
      $region75: #{stem_forward.2} parent=71 // pred_region
        %s955 = smul.u32 8, %s24
        %p956 = scmp.lt.s32.totalorder %s955, 15
        %s957 = scalar_select %p956, %s955, 15
        %s958 = smul.addr %s957, 8
        %s959 = scalar_lea.vmem %s10, %s958
      $region76: #{stem_forward.2} parent=71 // pred_fallthru
        _
      // Predicated region
      $region77: #{stem_forward.2} parent=71 // pred_check
        %p960 = pneg %p288
      $region78: #{stem_forward.2} parent=71 // pred_check_branch
        %962 = sbr.rel (%p960) target = $region80
      $region79: #{stem_forward.2} parent=71 // pred_region
        %s963 = smul.u32 8, %s24
        %p964 = scmp.lt.s32.totalorder %s963, 15
        %s965 = scalar_select %p964, %s963, 15
        %s966 = smul.addr %s965, 8
        %s967 = scalar_lea.vmem %s11, %s966
      $region80: #{stem_forward.2} parent=71 // pred_fallthru
        _
    $region72: #{stem_forward.2} parent=5 // pred_fallthru
      _
  $region6: #{stem_forward.2} parent=0 // loop_footer
    %s22 = sadd.s32 1, %s18
  $region7: #{stem_forward.2} parent=0 // loop_footer_branch
    %17 = sbr.rel target = $region3
  $region8: #{stem_forward.2} parent=0 // loop_exit
    _

// kernel: stem_forward.3
$region0: #{stem_forward.3}
  #allocation0 [shape = 'u32[]', space=smem, size = 0x4, offset = 0x4, fixed_abs, tag = 'smem constant byte address 0x4 - core index']
  #allocation1 [shape = 'u32[144,128]{1,0:T(1,128)}', space=vmem, size = 0x12000, scoped, tag = 'internal scratch']
  %s0 = inlined_call_operand.vmem [shape: f32[32,36], index: 0, kind: input, shape index: {}]
  %s1 = inlined_call_operand.vmem [shape: f32[32,144], index: 1, kind: input, shape index: {}]
  %s2 = inlined_call_operand.vmem [shape: f32[36,16], index: 2, kind: input, shape index: {}]
  %s3 = inlined_call_operand.vmem [shape: f32[144,16], index: 3, kind: input, shape index: {}]
  %s4 = inlined_call_operand.vmem [shape: f32[1,16], index: 4, kind: input, shape index: {}]
  %s5 = inlined_call_operand.vmem [shape: f32[1,16], index: 5, kind: input, shape index: {}]
  %s6 = inlined_call_operand.hbm [shape: f32[32,16], index: 6, kind: output, shape index: {}]
  %s7 = sld [smem:[#allocation0]]
  $region57: #{stem_forward.3} parent=0
    _
  %s9 = ssub.s32 1, %s7
  %s10 = scalar_select 0, %s9, %s7
  $region1: #{stem_forward.3} parent=0
    #allocation2 [shape = 'u8[16384]{0}', space=vmem, size = 0x4000, scoped, tag = 'output window, operand 0']
    #allocation3 [shape = 's32[2]{0}', space=sflag, size = 0x8, scoped, tag = 'scoped memory for stem_forward.3']
    %11 = vsyncpa [#allocation3], 0
    %s12 = scalar_lea.sflag [#allocation3], 1
    %13 = vsyncpa %s12, 0
    loop: start=0, step=1, limit=4
    $region2: #{stem_forward.3} parent=1 // loop_pre_header
      _
    $region3: #{stem_forward.3} parent=1 // loop_header
      %s15 = sphi 0, %s19
      %p16 = scmp.ge.s32.totalorder %s15, 4
      %s25 = sphi 0, %s27
      %s28 = sphi 0, %s25
      %s29 = sphi 0, %s28
      %s45 = sphi 0, %s29
      %s51 = sphi 0, %s53
      %s54 = sphi 0, %s51
      %s55 = sphi 0, %s54
      %s71 = sphi 0, %s55
      %s75 = sphi 0, %s75
      %s77 = sphi 0, %s75
      %s78 = sphi 0, %s77
      %s92 = sphi 0, %s78
      %s96 = sphi 0, %s96
      %s98 = sphi 0, %s96
      %s99 = sphi 0, %s98
      %s113 = sphi 0, %s99
      %s117 = sphi 0, %s117
      %s119 = sphi 0, %s117
      %s120 = sphi 0, %s119
      %s134 = sphi 0, %s120
      %s138 = sphi 0, %s138
      %s140 = sphi 0, %s138
      %s141 = sphi 0, %s140
      %s155 = sphi 0, %s141
      %s161 = sphi 0, %s163
      %s164 = sphi 0, %s161
      %s165 = sphi 0, %s164
      %s181 = sphi 0, %s165
    $region4: #{stem_forward.3} parent=1 // loop_header_branch
      %18 = sbr.rel (%p16) target = $region8
    $region5: #{stem_forward.3} parent=1 // loop_body
      %s20 = ssub.s32 %s15, 1
      %s21 = ssub.s32 %s15, 2
      %s22 = sadd.s32 %s15, 1
      %s23 = ssub.s32 %s15, %s22
      %p24 = scmp.eq.s32.totalorder %s23, 0
      %s26 = sadd.s32 %s25, 1
      %s27 = scalar_select %p24, %s25, %s26
      %p30 = pneg %p24
      %p31 = scmp.eq.s32.totalorder %s15, 1
      %p32 = por %p30, %p31
      %p33 = scmp.ne.s32.totalorder %s25, %s28
      %p34 = scmp.eq.s32.totalorder %s15, 0
      %p35 = por %p33, %p34
      %p36 = scmp.ne.s32.totalorder %s25, %s28
      %p37 = scmp.eq.s32.totalorder %s20, 1
      %p38 = por %p36, %p37
      %p39 = scmp.ne.s32.totalorder %s28, %s29
      %p40 = scmp.eq.s32.totalorder %s20, 0
      %p41 = por %p39, %p40
      %p42 = scmp.ne.s32.totalorder %s28, %s29
      %p43 = scmp.eq.s32.totalorder %s21, 1
      %p44 = por %p42, %p43
      %p46 = scmp.ne.s32.totalorder %s29, %s45
      %p47 = scmp.eq.s32.totalorder %s21, 0
      %p48 = por %p46, %p47
      %s49 = ssub.s32 %s15, %s22
      %p50 = scmp.eq.s32.totalorder %s49, 0
      %s52 = sadd.s32 %s51, 1
      %s53 = scalar_select %p50, %s51, %s52
      %p56 = pneg %p50
      %p57 = scmp.eq.s32.totalorder %s15, 1
      %p58 = por %p56, %p57
      %p59 = scmp.ne.s32.totalorder %s51, %s54
      %p60 = scmp.eq.s32.totalorder %s15, 0
      %p61 = por %p59, %p60
      %p62 = scmp.ne.s32.totalorder %s51, %s54
      %p63 = scmp.eq.s32.totalorder %s20, 1
      %p64 = por %p62, %p63
      %p65 = scmp.ne.s32.totalorder %s54, %s55
      %p66 = scmp.eq.s32.totalorder %s20, 0
      %p67 = por %p65, %p66
      %p68 = scmp.ne.s32.totalorder %s54, %s55
      %p69 = scmp.eq.s32.totalorder %s21, 1
      %p70 = por %p68, %p69
      %p72 = scmp.ne.s32.totalorder %s55, %s71
      %p73 = scmp.eq.s32.totalorder %s21, 0
      %p74 = por %p72, %p73
      %s76 = sadd.s32 %s75, 1
      %p79 = scmp.eq.s32.totalorder %s15, 1
      %p80 = scmp.ne.s32.totalorder %s75, %s77
      %p81 = scmp.eq.s32.totalorder %s15, 0
      %p82 = por %p80, %p81
      %p83 = scmp.ne.s32.totalorder %s75, %s77
      %p84 = scmp.eq.s32.totalorder %s20, 1
      %p85 = por %p83, %p84
      %p86 = scmp.ne.s32.totalorder %s77, %s78
      %p87 = scmp.eq.s32.totalorder %s20, 0
      %p88 = por %p86, %p87
      %p89 = scmp.ne.s32.totalorder %s77, %s78
      %p90 = scmp.eq.s32.totalorder %s21, 1
      %p91 = por %p89, %p90
      %p93 = scmp.ne.s32.totalorder %s78, %s92
      %p94 = scmp.eq.s32.totalorder %s21, 0
      %p95 = por %p93, %p94
      %s97 = sadd.s32 %s96, 1
      %p100 = scmp.eq.s32.totalorder %s15, 1
      %p101 = scmp.ne.s32.totalorder %s96, %s98
      %p102 = scmp.eq.s32.totalorder %s15, 0
      %p103 = por %p101, %p102
      %p104 = scmp.ne.s32.totalorder %s96, %s98
      %p105 = scmp.eq.s32.totalorder %s20, 1
      %p106 = por %p104, %p105
      %p107 = scmp.ne.s32.totalorder %s98, %s99
      %p108 = scmp.eq.s32.totalorder %s20, 0
      %p109 = por %p107, %p108
      %p110 = scmp.ne.s32.totalorder %s98, %s99
      %p111 = scmp.eq.s32.totalorder %s21, 1
      %p112 = por %p110, %p111
      %p114 = scmp.ne.s32.totalorder %s99, %s113
      %p115 = scmp.eq.s32.totalorder %s21, 0
      %p116 = por %p114, %p115
      %s118 = sadd.s32 %s117, 1
      %p121 = scmp.eq.s32.totalorder %s15, 1
      %p122 = scmp.ne.s32.totalorder %s117, %s119
      %p123 = scmp.eq.s32.totalorder %s15, 0
      %p124 = por %p122, %p123
      %p125 = scmp.ne.s32.totalorder %s117, %s119
      %p126 = scmp.eq.s32.totalorder %s20, 1
      %p127 = por %p125, %p126
      %p128 = scmp.ne.s32.totalorder %s119, %s120
      %p129 = scmp.eq.s32.totalorder %s20, 0
      %p130 = por %p128, %p129
      %p131 = scmp.ne.s32.totalorder %s119, %s120
      %p132 = scmp.eq.s32.totalorder %s21, 1
      %p133 = por %p131, %p132
      %p135 = scmp.ne.s32.totalorder %s120, %s134
      %p136 = scmp.eq.s32.totalorder %s21, 0
      %p137 = por %p135, %p136
      %s139 = sadd.s32 %s138, 1
      %p142 = scmp.eq.s32.totalorder %s15, 1
      %p143 = scmp.ne.s32.totalorder %s138, %s140
      %p144 = scmp.eq.s32.totalorder %s15, 0
      %p145 = por %p143, %p144
      %p146 = scmp.ne.s32.totalorder %s138, %s140
      %p147 = scmp.eq.s32.totalorder %s20, 1
      %p148 = por %p146, %p147
      %p149 = scmp.ne.s32.totalorder %s140, %s141
      %p150 = scmp.eq.s32.totalorder %s20, 0
      %p151 = por %p149, %p150
      %p152 = scmp.ne.s32.totalorder %s140, %s141
      %p153 = scmp.eq.s32.totalorder %s21, 1
      %p154 = por %p152, %p153
      %p156 = scmp.ne.s32.totalorder %s141, %s155
      %p157 = scmp.eq.s32.totalorder %s21, 0
      %p158 = por %p156, %p157
      %s159 = ssub.s32 %s15, %s22
      %p160 = scmp.eq.s32.totalorder %s159, 0
      %s162 = sadd.s32 %s161, 1
      %s163 = scalar_select %p160, %s161, %s162
      %p166 = pneg %p160
      %p167 = scmp.eq.s32.totalorder %s15, 1
      %p168 = por %p166, %p167
      %p169 = scmp.ne.s32.totalorder %s161, %s164
      %p170 = scmp.eq.s32.totalorder %s15, 0
      %p171 = por %p169, %p170
      %p172 = scmp.ne.s32.totalorder %s161, %s164
      %p173 = scmp.eq.s32.totalorder %s20, 1
      %p174 = por %p172, %p173
      %p175 = scmp.ne.s32.totalorder %s164, %s165
      %p176 = scmp.eq.s32.totalorder %s20, 0
      %p177 = por %p175, %p176
      %p178 = scmp.ne.s32.totalorder %s164, %s165
      %p179 = scmp.eq.s32.totalorder %s21, 1
      %p180 = por %p178, %p179
      %p182 = scmp.ne.s32.totalorder %s165, %s181
      %p183 = scmp.eq.s32.totalorder %s21, 0
      %p184 = por %p182, %p183
      %p185 = scmp.le.s32.totalorder 1, %s15
      %p186 = scmp.lt.s32.totalorder %s15, 3
      %p187 = pnand %p185, %p186
      %p188 = pneg %p187
      // Predicated region
      $region9: #{stem_forward.3} parent=5 // pred_check
        _
      $region10: #{stem_forward.3} parent=5 // pred_check_branch
        %190 = sbr.rel (%p187) target = $region12
      $region11: #{stem_forward.3} parent=5 // pred_region
        %s191 = ssub.s32 %s15, 1
        // Predicated region
        $region13: #{stem_forward.3} parent=11 // pred_check
          %p192 = pneg %p88
        $region14: #{stem_forward.3} parent=11 // pred_check_branch
          %194 = sbr.rel (%p192) target = $region16
        $region15: #{stem_forward.3} parent=11 // pred_region
          _
        $region16: #{stem_forward.3} parent=11 // pred_fallthru
          _
        // Predicated region
        $region17: #{stem_forward.3} parent=11 // pred_check
          %p195 = pneg %p109
        $region18: #{stem_forward.3} parent=11 // pred_check_branch
          %197 = sbr.rel (%p195) target = $region20
        $region19: #{stem_forward.3} parent=11 // pred_region
          _
        $region20: #{stem_forward.3} parent=11 // pred_fallthru
          _
        // Predicated region
        $region21: #{stem_forward.3} parent=11 // pred_check
          %p198 = pneg %p130
        $region22: #{stem_forward.3} parent=11 // pred_check_branch
          %200 = sbr.rel (%p198) target = $region24
        $region23: #{stem_forward.3} parent=11 // pred_region
          _
        $region24: #{stem_forward.3} parent=11 // pred_fallthru
          _
        // Predicated region
        $region25: #{stem_forward.3} parent=11 // pred_check
          %p201 = pneg %p151
        $region26: #{stem_forward.3} parent=11 // pred_check_branch
          %203 = sbr.rel (%p201) target = $region28
        $region27: #{stem_forward.3} parent=11 // pred_region
          _
        $region28: #{stem_forward.3} parent=11 // pred_fallthru
          _
      $region12: #{stem_forward.3} parent=5 // pred_fallthru
        _
      %p204 = scmp.lt.s32.totalorder %s15, 2
      // Predicated region
      $region29: #{stem_forward.3} parent=5 // pred_check
        %p205 = pneg %p204
      $region30: #{stem_forward.3} parent=5 // pred_check_branch
        %207 = sbr.rel (%p205) target = $region32
      $region31: #{stem_forward.3} parent=5 // pred_region
        // Predicated region
        $region33: #{stem_forward.3} parent=31 // pred_check
          %p208 = pneg %p35
        $region34: #{stem_forward.3} parent=31 // pred_check_branch
          %210 = sbr.rel (%p208) target = $region36
        $region35: #{stem_forward.3} parent=31 // pred_region
          %s211 = smul.u32 2, %s15
          %p212 = scmp.lt.s32.totalorder %s211, 3
          %s213 = scalar_select %p212, %s211, 3
          %s214 = smul.addr %s213, 8
          %s215 = scalar_lea.vmem %s0, %s214
          %s216 = smul.u32 2, %s15
        $region36: #{stem_forward.3} parent=31 // pred_fallthru
          _
        // Predicated region
        $region37: #{stem_forward.3} parent=31 // pred_check
          %p217 = pneg %p61
        $region38: #{stem_forward.3} parent=31 // pred_check_branch
          %219 = sbr.rel (%p217) target = $region40
        $region39: #{stem_forward.3} parent=31 // pred_region
          %s220 = smul.u32 2, %s15
          %p221 = scmp.lt.s32.totalorder %s220, 3
          %s222 = scalar_select %p221, %s220, 3
          %s223 = smul.addr %s222, 2
          %s224 = smul.addr %s223, 8
          %s225 = scalar_lea.vmem %s1, %s224
          %s226 = smul.u32 2, %s15
        $region40: #{stem_forward.3} parent=31 // pred_fallthru
          _
      $region32: #{stem_forward.3} parent=5 // pred_fallthru
        _
      %p227 = scmp.le.s32.totalorder 1, %s15
      %p228 = scmp.lt.s32.totalorder %s15, 3
      %p229 = pnand %p227, %p228
      %p230 = pneg %p229
      // Predicated region
      $region41: #{stem_forward.3} parent=5 // pred_check
        _
      $region42: #{stem_forward.3} parent=5 // pred_check_branch
        %232 = sbr.rel (%p229) target = $region44
      $region43: #{stem_forward.3} parent=5 // pred_region
        %s233 = ssub.s32 %s15, 1
        %s234 = smul.u32 2, %s20
        %p235 = scmp.lt.s32.totalorder %s234, 3
        %s236 = scalar_select %p235, %s234, 3
        %s237 = smul.addr %s236, 8
        %s238 = scalar_lea.vmem %s0, %s237
        %p239 = pneg %p41
        %p240 = pneg %p38
        %s241 = smul.u32 2, %s20
        %p242 = scmp.lt.s32.totalorder %s241, 3
        %s243 = scalar_select %p242, %s241, 3
        %s244 = smul.addr %s243, 2
        %s245 = smul.addr %s244, 8
        %s246 = scalar_lea.vmem %s1, %s245
        %p247 = pneg %p67
        %p248 = pneg %p64
        %p249 = pneg %p88
        %p250 = pneg %p85
        %p251 = pneg %p109
        %p252 = pneg %p106
        %p253 = pneg %p130
        %p254 = pneg %p127
        %p255 = pneg %p151
        %p256 = pneg %p148
        %p257 = pneg %p177
        %p258 = pneg %p174
        %s259 = sand.u32 %s164, 1
        %s260 = scalar_lea.sflag [#allocation3], %s259
        %s261 = sand.u32 %s164, 1
        %s262 = smul.addr %s261, 16
        %s263 = scalar_lea.vmem [#allocation2], %s262
        %s264 = smul.u32 2, %s20
        %p265 = scmp.lt.s32.totalorder %s264, 3
        %s266 = scalar_select %p265, %s264, 3
        %s267 = smul.addr %s266, 8
        %s268 = scalar_lea.vmem %s0, %s267
        %s269 = smul.u32 2, %s20
        %s270 = smul.u32 2, %s20
        %p271 = scmp.lt.s32.totalorder %s270, 3
        %s272 = scalar_select %p271, %s270, 3
        %s273 = smul.addr %s272, 2
        %s274 = smul.addr %s273, 8
        %s275 = scalar_lea.vmem %s1, %s274
        %s276 = smul.u32 2, %s20
        %s277 = smul.u32 2, %s20
        %v278 = vld [vmem:[%s268] sm:$0xff]
        %v279 = vld [vmem:[%s268 + $0x8] sm:$0xff]
        %v280 = vld [vmem:[%s2] sm:$0xff]
        %v281 = vld [vmem:[%s2 + $0x8] sm:$0xff]
        %v282 = vld [vmem:[%s2 + $0x10] sm:$0xff]
        %v283 = vld [vmem:[%s2 + $0x18] sm:$0xff]
        %v284 = vld [vmem:[%s2 + $0x20] sm:$0xf]
        %v285 = vld [vmem:[%s275] sm:$0xff]
        %v286 = vld [vmem:[%s275 + $0x8] sm:$0xff]
        %v287 = vld [vmem:[%s275 + $0x10] sm:$0xff]
        %v288 = vld [vmem:[%s275 + $0x18] sm:$0xff]
        %v289 = vld [vmem:[%s3] sm:$0xff]
        %v290 = vld [vmem:[%s3 + $0x8] sm:$0xff]
        %v291 = vld [vmem:[%s3 + $0x10] sm:$0xff]
        %v292 = vld [vmem:[%s3 + $0x18] sm:$0xff]
        %v293 = vld [vmem:[%s3 + $0x20] sm:$0xff]
        %v294 = vld [vmem:[%s3 + $0x28] sm:$0xff]
        %v295 = vld [vmem:[%s3 + $0x30] sm:$0xff]
        %v296 = vld [vmem:[%s3 + $0x38] sm:$0xff]
        %v297 = vld [vmem:[%s3 + $0x40] sm:$0xff]
        %v298 = vld [vmem:[%s3 + $0x48] sm:$0xff]
        %v299 = vld [vmem:[%s3 + $0x50] sm:$0xff]
        %v300 = vld [vmem:[%s3 + $0x58] sm:$0xff]
        %v301 = vld [vmem:[%s3 + $0x60] sm:$0xff]
        %v302 = vld [vmem:[%s3 + $0x68] sm:$0xff]
        %v303 = vld [vmem:[%s3 + $0x70] sm:$0xff]
        %v304 = vld [vmem:[%s3 + $0x78] sm:$0xff]
        %v305 = vld [vmem:[%s3 + $0x80] sm:$0xff]
        %v306 = vld [vmem:[%s3 + $0x88] sm:$0xff]
        %vm307 = vcmask 130048
        %v309 = vsel %vm307, %v286, 0
        %v312 = vsel %vm307, %v288, 0
        %314 = vmatprep.subr.mxu0 0.0
        %315 = vmatpush1.msra.mxu0 %v289
        %316 = vmatprep.subr.mxu0 0.0
        %317 = vmatpush1.msra.mxu0 %v290
        %318 = vmatprep.subr.mxu0 0.0
        %319 = vmatpush1.msra.mxu0 %v291
        %320 = vmatprep.subr.mxu0 0.0
        %321 = vmatpush1.msra.mxu0 %v292
        %322 = vmatprep.subr.mxu0 0.0
        %323 = vmatpush1.msra.mxu0 %v293
        %324 = vmatprep.subr.mxu0 0.0
        %325 = vmatpush1.msra.mxu0 %v294
        %326 = vmatprep.subr.mxu0 0.0
        %327 = vmatpush1.msra.mxu0 %v295
        %328 = vmatprep.subr.mxu0 0.0
        %329 = vmatpush1.msra.mxu0 %v296
        %330 = vmatprep.subr.mxu0 0.0
        %331 = vmatpush1.msra.mxu0 %v297
        %332 = vmatprep.subr.mxu0 0.0
        %333 = vmatpush1.msra.mxu0 %v298
        %334 = vmatprep.subr.mxu0 0.0
        %335 = vmatpush1.msra.mxu0 %v299
        %336 = vmatprep.subr.mxu0 0.0
        %337 = vmatpush1.msra.mxu0 %v300
        %338 = vmatprep.subr.mxu0 0.0
        %339 = vmatpush1.msra.mxu0 %v301
        %340 = vmatprep.subr.mxu0 0.0
        %341 = vmatpush1.msra.mxu0 %v302
        %342 = vmatprep.subr.mxu0 0.0
        %343 = vmatpush1.msra.mxu0 %v303
        %344 = vmatprep.subr.mxu0 0.0
        %345 = vmatpush1.msra.mxu0 %v304
        %346 = vmatprep.subr.mxu0 0.0
        %347 = vmatpush1.msra.mxu0 %v305
        %348 = vmatprep.subr.mxu0 0.0
        %349 = vmatpush1.msra.mxu0 %v306
        %350 = vmatprep.subr.mxu0 0.0
        %351 = vmatpush1.msra.mxu0 0.0
        %352 = vmatprep.subr.mxu0 0.0
        %353 = vmatpush1.msra.mxu0 0.0
        %354 = vmatprep.subr.mxu0 0.0
        %355 = vmatpush1.msra.mxu0 0.0
        %356 = vmatprep.subr.mxu0 0.0
        %357 = vmatpush1.msra.mxu0 0.0
        %358 = vmatprep.subr.mxu0 0.0
        %359 = vmatpush1.msra.mxu0 0.0
        %360 = vmatprep.subr.mxu0 0.0
        %361 = vmatpush1.msra.mxu0 0.0
        %362 = vmatprep.subr.mxu0 0.0
        %363 = vmatpush1.msra.mxu0 0.0
        %364 = vmatprep.subr.mxu0 0.0
        %365 = vmatpush1.msra.mxu0 0.0
        %366 = vmatprep.subr.mxu0 0.0
        %367 = vmatpush1.msra.mxu0 0.0
        %368 = vmatprep.subr.mxu0 0.0
        %369 = vmatpush1.msra.mxu0 0.0
        %370 = vmatprep.subr.mxu0 0.0
        %371 = vmatpush1.msra.mxu0 0.0
        %372 = vmatprep.subr.mxu0 0.0
        %373 = vmatpush1.msra.mxu0 0.0
        %374 = vmatprep.subr.mxu0 0.0
        %375 = vmatpush1.msra.mxu0 0.0
        %376 = vmatprep.subr.mxu0 0.0
        %377 = vmatpush1.msra.mxu0 0.0
        %378 = vmatprep.mubr.f32.mxu0 %v309
        %379 = vmatmul.mubr.f32.gmra.mrb[0].mxu0 %v285
        %v380 = vpop.f32.mrb[0].mxu0
        %v381 = vadd.f32 0.0, %v380
        %v382 = vpop.f32.mrb[0].mxu0
        %383 = vmatprep.mubr.f32.mxu0 %v312
        %384 = vmatmul.mubr.f32.gmra.mrb[0].mxu0 %v287
        %v385 = vpop.f32.mrb[0].mxu0
        %v386 = vadd.f32 0.0, %v385
        %v387 = vpop.f32.mrb[0].mxu0
        %388 = vdwg.mxu0
        %vm389 = vcmask 293888
        %v391 = vsel %vm389, %v278, 0
        %v394 = vsel %vm389, %v279, 0
        %vm396 = vcmask 1043456
        %v398 = vsel %vm396, %v284, 0
        %400 = vmatprep.subr.mxu0 0.0
        %401 = vmatpush1.msra.mxu0 %v280
        %402 = vmatprep.subr.mxu0 0.0
        %403 = vmatpush1.msra.mxu0 %v281
        %404 = vmatprep.subr.mxu0 0.0
        %405 = vmatpush1.msra.mxu0 %v282
        %406 = vmatprep.subr.mxu0 0.0
        %407 = vmatpush1.msra.mxu0 %v283
        %408 = vmatprep.subr.mxu0 0.0
        %409 = vmatpush1.msra.mxu0 %v398
        %410 = vmatprep.subr.mxu0 0.0
        %411 = vmatpush1.msra.mxu0 0.0
        %412 = vmatprep.subr.mxu0 0.0
        %413 = vmatpush1.msra.mxu0 0.0
        %414 = vmatprep.subr.mxu0 0.0
        %415 = vmatpush1.msra.mxu0 0.0
        %416 = vmatprep.subr.mxu0 0.0
        %417 = vmatpush1.msra.mxu0 0.0
        %418 = vmatprep.subr.mxu0 0.0
        %419 = vmatpush1.msra.mxu0 0.0
        %420 = vmatprep.subr.mxu0 0.0
        %421 = vmatpush1.msra.mxu0 0.0
        %422 = vmatprep.subr.mxu0 0.0
        %423 = vmatpush1.msra.mxu0 0.0
        %424 = vmatprep.subr.mxu0 0.0
        %425 = vmatpush1.msra.mxu0 0.0
        %426 = vmatprep.subr.mxu0 0.0
        %427 = vmatpush1.msra.mxu0 0.0
        %428 = vmatprep.subr.mxu0 0.0
        %429 = vmatpush1.msra.mxu0 0.0
        %430 = vmatprep.subr.mxu0 0.0
        %431 = vmatpush1.msra.mxu0 0.0
        %432 = vmatprep.subr.mxu0 0.0
        %433 = vmatpush1.msra.mxu0 0.0
        %434 = vmatprep.subr.mxu0 0.0
        %435 = vmatpush1.msra.mxu0 0.0
        %436 = vmatprep.subr.mxu0 0.0
        %437 = vmatpush1.msra.mxu0 0.0
        %438 = vmatprep.subr.mxu0 0.0
        %439 = vmatpush1.msra.mxu0 0.0
        %440 = vmatprep.subr.mxu0 0.0
        %441 = vmatpush1.msra.mxu0 0.0
        %442 = vmatprep.subr.mxu0 0.0
        %443 = vmatpush1.msra.mxu0 0.0
        %444 = vmatprep.subr.mxu0 0.0
        %445 = vmatpush1.msra.mxu0 0.0
        %446 = vmatprep.subr.mxu0 0.0
        %447 = vmatpush1.msra.mxu0 0.0
        %448 = vmatprep.subr.mxu0 0.0
        %449 = vmatpush1.msra.mxu0 0.0
        %450 = vmatprep.subr.mxu0 0.0
        %451 = vmatpush1.msra.mxu0 0.0
        %452 = vmatprep.subr.mxu0 0.0
        %453 = vmatpush1.msra.mxu0 0.0
        %454 = vmatprep.subr.mxu0 0.0
        %455 = vmatpush1.msra.mxu0 0.0
        %456 = vmatprep.subr.mxu0 0.0
        %457 = vmatpush1.msra.mxu0 0.0
        %458 = vmatprep.subr.mxu0 0.0
        %459 = vmatpush1.msra.mxu0 0.0
        %460 = vmatprep.subr.mxu0 0.0
        %461 = vmatpush1.msra.mxu0 0.0
        %462 = vmatprep.subr.mxu0 0.0
        %463 = vmatpush1.msra.mxu0 0.0
        %464 = vmatprep.mubr.f32.mxu0 0.0
        %465 = vmatmul.mubr.f32.gmra.mrb[0].mxu0 %v391
        %v466 = vpop.f32.mrb[0].mxu0
        %v467 = vadd.f32 %v381, %v466
        %v468 = vpop.f32.mrb[0].mxu0
        %469 = vmatprep.mubr.f32.mxu0 0.0
        %470 = vmatmul.mubr.f32.gmra.mrb[0].mxu0 %v394
        %v471 = vpop.f32.mrb[0].mxu0
        %v472 = vadd.f32 %v386, %v471
        %v473 = vpop.f32.mrb[0].mxu0
        %474 = vdwg.mxu0
        %v475 = vld [vmem:[%s4] sm:$0x1]
        %v477 = vlaneseq
        %v478 = vshrl.u32 %v477, 7
        %v479 = vsub.s32 0, %v478
        %v480 = vrot.slane %v475, %v479
        %v482 = vmul.f32 %v467, %v480
        %v483 = vmul.f32 %v472, %v480
        %v484 = vld [vmem:[%s5] sm:$0x1]
        %v486 = vlaneseq
        %v487 = vshrl.u32 %v486, 7
        %v488 = vsub.s32 0, %v487
        %v489 = vrot.slane %v484, %v488
        %v491 = vadd.f32 %v482, %v489
        %v492 = vadd.f32 %v483, %v489
        %v493 = vmax.f32 %v491, 0.0
        %v494 = vmax.f32 %v492, 0.0
        %495 = vst.msk [vmem:[%s263] sm:$0xff] %vm307, %v493
        %496 = vst.msk [vmem:[%s263 + $0x8] sm:$0xff] %vm307, %v494
        %s497 = sand.u32 %s164, 1
        %s498 = scalar_lea.sflag [#allocation3], %s497
        %s499 = sand.u32 %s164, 1
        %s500 = smul.addr %s499, 16
        %s501 = scalar_lea.vmem [#allocation2], %s500
        // Predicated region
        $region45: #{stem_forward.3} parent=43 // pred_check
          %p502 = pneg %p174
        $region46: #{stem_forward.3} parent=43 // pred_check_branch
          %504 = sbr.rel (%p502) target = $region48
        $region47: #{stem_forward.3} parent=43 // pred_region
          %s505 = smul.u32 2, %s20
          %s507 = ssub.s32 256, 256
          %508 = vsyncadd %s498, %s507
          %s509 = smul.addr %s505, 128
          %s510 = scalar_lea.hbm %s6, %s509
          %s511 = sshll.u32 %s501, 4
          %s512 = int_to_ptr.vmem [resolvable:$true] %s511
          %517 = dma.vmem_to_hbm [thread:$0]  %s512, 256, %s510, %s498, 128, 128, 8
        $region48: #{stem_forward.3} parent=43 // pred_fallthru
          _
      $region44: #{stem_forward.3} parent=5 // pred_fallthru
        _
      %p518 = scmp.le.s32.totalorder 2, %s15
      // Predicated region
      $region49: #{stem_forward.3} parent=5 // pred_check
        %p519 = pneg %p518
      $region50: #{stem_forward.3} parent=5 // pred_check_branch
        %521 = sbr.rel (%p519) target = $region52
      $region51: #{stem_forward.3} parent=5 // pred_region
        %s522 = ssub.s32 %s15, 2
        // Predicated region
        $region53: #{stem_forward.3} parent=51 // pred_check
          %p523 = pneg %p180
        $region54: #{stem_forward.3} parent=51 // pred_check_branch
          %525 = sbr.rel (%p523) target = $region56
        $region55: #{stem_forward.3} parent=51 // pred_region
          %s526 = sand.u32 %s165, 1
          %s527 = scalar_lea.sflag [#allocation3], %s526
          %s528 = sand.u32 %s165, 1
          %s529 = smul.addr %s528, 16
          %s530 = scalar_lea.vmem [#allocation2], %s529
          %531 = dma.done %s527, 256
        $region56: #{stem_forward.3} parent=51 // pred_fallthru
          _
      $region52: #{stem_forward.3} parent=5 // pred_fallthru
        _
    $region6: #{stem_forward.3} parent=1 // loop_footer
      %s19 = sadd.s32 1, %s15
    $region7: #{stem_forward.3} parent=1 // loop_footer_branch
      %14 = sbr.rel target = $region3
    $region8: #{stem_forward.3} parent=1 // loop_exit
      _
    %532 = vsyncpa [#allocation3], 1
    %s533 = scalar_lea.sflag [#allocation3], 1
    %534 = vsyncpa %s533, 1

</llo_original>
